<compile_context>
chip_gen: v7x
topology: tpu7x:2x2x1
jax: 0.10.0
libtpu: 0.0.40
codegen_flags: <defaults>
</compile_context>

<pallas_src>
import jax
import jax.numpy as jnp
from jax import lax
from jax.experimental import pallas as pl
from jax.experimental.pallas import tpu as pltpu

# ---- small synthetic configuration -----------------------------------------
SEQ = 8
BATCH = 2
EMB = 32            # embedding_size
HID = 32            # hidden_size (== EMB because tie_weights=True)
NLAYERS = 2
VOCAB = 32
PAD_IDX = 0
DROPOUT = 0.0       # dropout layers are identity at p=0

VPAD = 128          # vocab padded to a full lane width -> dense (unmasked) logits store
STEP_ROWS = 8       # sublane-aligned row stride per time step in the h_top scratch


# ---- Pallas kernel: whole LSTM stack + batched decoder in one invocation ----
def _lstm_decoder_kernel(emb_ref,      # (SEQ, B, E)        all time-step embeddings
                         wcat_ref,     # (L, E+H, 4H)       fused [W_ih ; W_hh], pre-transposed
                         bias_ref,     # (L, 1, 4H)         b_ih + b_hh
                         decw_ref,     # (H, VPAD)          tied decoder weight, vocab-padded
                         decb_ref,     # (1, VPAD)          decoder bias, vocab-padded
                         logits_ref,   # out: (SEQ*8, VPAD) lane-dense logits slab
                         hN_ref,       # out: (L, B, H)     final hidden state
                         cN_ref,       # out: (L, B, H)     final cell state
                         htop_sc):     # scratch (SEQ*8, H) staged top-layer h per step
    # Hoist weights / bias broadcasts out of the unrolled time loop
    # (JAX does not CSE broadcast_in_dim).
    w_cat = [wcat_ref[l] for l in range(NLAYERS)]                      # (E+H, 4H) each
    b_cat = [jnp.broadcast_to(bias_ref[l], (BATCH, 4 * HID)) for l in range(NLAYERS)]
    lane = lax.broadcasted_iota(jnp.int32, (BATCH, 4 * HID), 1)
    g_mask = (lane >= 2 * HID) & (lane < 3 * HID)   # tanh lanes (gate g); PyTorch order i,f,g,o

    htop_sc[...] = jnp.zeros_like(htop_sc)

    h = [jnp.zeros((BATCH, HID), jnp.float32) for _ in range(NLAYERS)]
    c = [jnp.zeros((BATCH, HID), jnp.float32) for _ in range(NLAYERS)]

    for t in range(SEQ):                            # time recurrence unrolled in-kernel
        x = emb_ref[t]                              # (B, E)
        for l in range(NLAYERS):                    # static unroll over layers
            xin = jnp.concatenate([x, h[l]], axis=1)               # (B, E+H) lane concat
            gates = (jnp.dot(xin, w_cat[l], preferred_element_type=jnp.float32)
                     + b_cat[l])                                   # (B, 4H)
            # Full-width activations: one sigmoid + one tanh over the whole
            # (B, 4H) vreg, then lane-mask select -> [σ(i), σ(f), tanh(g), σ(o)].
            act = jnp.where(g_mask, jnp.tanh(gates), jax.nn.sigmoid(gates))
            i_ = act[:, 0 * HID:1 * HID]
            f_ = act[:, 1 * HID:2 * HID]
            g_ = act[:, 2 * HID:3 * HID]
            o_ = act[:, 3 * HID:4 * HID]
            c_new = f_ * c[l] + i_ * g_
            h_new = o_ * jnp.tanh(c_new)
            h[l] = h_new
            c[l] = c_new
            x = h_new                               # dropout p=0 between layers

        # stage top-layer h at a sublane-aligned row offset for the batched decoder
        htop_sc[t * STEP_ROWS:t * STEP_ROWS + BATCH, :] = x

    # Batched, lane-dense decoder: one (SEQ*8, H) @ (H, VPAD) matmul + one slab store.
    # TODO(synk): at realistic HID/VOCAB sizes, tile the vocab axis on a "parallel"
    # grid dimension sized against v7x's 64 MiB VMEM instead of a resident block.
    logits_ref[...] = (jnp.dot(htop_sc[...], decw_ref[...],
                               preferred_element_type=jnp.float32)
                       + decb_ref[...])

    for l in range(NLAYERS):
        hN_ref[l] = h[l]
        cN_ref[l] = c[l]


@jax.jit
def rnn_context_forward(input_ids, emb_table, wcat, bias, dec_w_pad, dec_b_pad):
    """input_ids: (SEQ, BATCH) int32. Returns (logits (SEQ,BATCH,VOCAB), (h_n, c_n))."""
    # Embedding lookup (glue; padding row of the table is already zero).
    # TODO(synk): at real EMB/VOCAB sizes, move this gather into the kernel via
    # PrefetchScalarGridSpec(num_scalar_prefetch=1) + a pl.Element row-gather BlockSpec.
    emb = jnp.take(emb_table, input_ids, axis=0)        # (SEQ, BATCH, EMB)
    # dropout p=0 -> identity

    logits_pad, h_n, c_n = pl.pallas_call(
        _lstm_decoder_kernel,
        out_shape=(
            jax.ShapeDtypeStruct((SEQ * STEP_ROWS, VPAD), jnp.float32),
            jax.ShapeDtypeStruct((NLAYERS, BATCH, HID), jnp.float32),
            jax.ShapeDtypeStruct((NLAYERS, BATCH, HID), jnp.float32),
        ),
        # no grid: single invocation, every (tiny) operand fully resident in VMEM
        scratch_shapes=[pltpu.VMEM((SEQ * STEP_ROWS, HID), jnp.float32)],
    )(emb, wcat, bias, dec_w_pad, dec_b_pad)

    logits = logits_pad.reshape(SEQ, STEP_ROWS, VPAD)[:, :BATCH, :VOCAB]
    return logits, (h_n, c_n)


# ---- pure-JAX reference (mirrors torch.nn.LSTM + Linear) --------------------
def _reference_forward(input_ids, emb_table, wih, whh, bih, bhh, dec_w, dec_b):
    emb = jnp.take(emb_table, input_ids, axis=0)
    h = jnp.zeros((NLAYERS, BATCH, HID), jnp.float32)
    c = jnp.zeros((NLAYERS, BATCH, HID), jnp.float32)
    outs = []
    for t in range(SEQ):
        x = emb[t]
        new_h, new_c = [], []
        for l in range(NLAYERS):
            gates = x @ wih[l].T + h[l] @ whh[l].T + bih[l] + bhh[l]
            i, f, g, o = jnp.split(gates, 4, axis=-1)
            cc = jax.nn.sigmoid(f) * c[l] + jax.nn.sigmoid(i) * jnp.tanh(g)
            hh = jax.nn.sigmoid(o) * jnp.tanh(cc)
            new_h.append(hh); new_c.append(cc)
            x = hh
        h = jnp.stack(new_h); c = jnp.stack(new_c)
        outs.append(x @ dec_w.T + dec_b)
    return jnp.stack(outs), h, c


# ---- deterministic parameter construction -----------------------------------
def make_params(key):
    ks = jax.random.split(key, 8)
    initrange = 0.01
    # encoder / (tied) decoder weight, padding row zeroed
    enc_w = jax.random.uniform(ks[0], (VOCAB, EMB), jnp.float32, -initrange, initrange)
    enc_w = enc_w.at[PAD_IDX].set(0.0)
    dec_w = enc_w                                   # tie_weights=True
    k = 1.0 / jnp.sqrt(jnp.float32(HID))
    dec_b = jax.random.uniform(ks[1], (VOCAB,), jnp.float32, -k, k)
    # LSTM params (layer 0 input dim == EMB == HID, so all layers stack)
    wih = jax.random.uniform(ks[2], (NLAYERS, 4 * HID, HID), jnp.float32, -k, k)
    whh = jax.random.uniform(ks[3], (NLAYERS, 4 * HID, HID), jnp.float32, -k, k)
    bih = jax.random.uniform(ks[4], (NLAYERS, 4 * HID), jnp.float32, -k, k)
    bhh = jax.random.uniform(ks[5], (NLAYERS, 4 * HID), jnp.float32, -k, k)
    return enc_w, dec_w, dec_b, wih, whh, bih, bhh, ks[6]


if __name__ == "__main__":
    key = jax.random.PRNGKey(0)
    enc_w, dec_w, dec_b, wih, whh, bih, bhh, kin = make_params(key)

    input_ids = jax.random.randint(kin, (SEQ, BATCH), 0, VOCAB, dtype=jnp.int32)

    # kernel-friendly (pre-transposed / fused / padded) parameter layouts
    wih_t = jnp.transpose(wih, (0, 2, 1))            # (L, E, 4H)
    whh_t = jnp.transpose(whh, (0, 2, 1))            # (L, H, 4H)
    wcat = jnp.concatenate([wih_t, whh_t], axis=1)   # (L, E+H, 4H) fused gate weight
    bias = (bih + bhh).reshape(NLAYERS, 1, 4 * HID)  # (L, 1, 4H)
    dec_w_pad = jnp.zeros((HID, VPAD), jnp.float32).at[:, :VOCAB].set(dec_w.T)
    dec_b_pad = jnp.zeros((1, VPAD), jnp.float32).at[:, :VOCAB].set(dec_b)

    logits, (h_n, c_n) = rnn_context_forward(
        input_ids, enc_w, wcat, bias, dec_w_pad, dec_b_pad)
    jax.block_until_ready((logits, h_n, c_n))

    ref_logits, ref_h, ref_c = _reference_forward(
        input_ids, enc_w, wih, whh, bih, bhh, dec_w, dec_b)
    assert logits.shape == (SEQ, BATCH, VOCAB)
    assert h_n.shape == (NLAYERS, BATCH, HID) and c_n.shape == (NLAYERS, BATCH, HID)
    assert jnp.allclose(logits, ref_logits, rtol=1e-4, atol=1e-5)
    assert jnp.allclose(h_n, ref_h, rtol=1e-4, atol=1e-5)
    assert jnp.allclose(c_n, ref_c, rtol=1e-4, atol=1e-5)

    print("KERNEL_OK")
</pallas_src>

<mosaic_0001>
module attributes {stable_mosaic.version = 11 : i64} {
  func.func @_lstm_decoder_kernel(%arg0: memref<8x2x32xf32, #tpu.memory_space<vmem>>, %arg1: memref<2x64x128xf32, #tpu.memory_space<vmem>>, %arg2: memref<2x1x128xf32, #tpu.memory_space<vmem>>, %arg3: memref<32x128xf32, #tpu.memory_space<vmem>>, %arg4: memref<1x128xf32, #tpu.memory_space<vmem>>, %arg5: memref<64x128xf32, #tpu.memory_space<vmem>>, %arg6: memref<2x2x32xf32, #tpu.memory_space<vmem>>, %arg7: memref<2x2x32xf32, #tpu.memory_space<vmem>>, %arg8: memref<64x32xf32, #tpu.memory_space<vmem>>) attributes {dimension_semantics = [], scalar_prefetch = 0 : i64, scratch_operands = 1 : i64, tpu.core_type = #tpu.core_type<tc>} {
    %c0 = arith.constant 0 : index
    %c0_0 = arith.constant 0 : index
    %c0_1 = arith.constant 0 : index
    %0 = vector.load %arg1[%c0, %c0_0, %c0_1] : memref<2x64x128xf32, #tpu.memory_space<vmem>>, vector<1x64x128xf32>
    %1 = vector.shape_cast %0 : vector<1x64x128xf32> to vector<64x128xf32>
    %c1 = arith.constant 1 : index
    %c0_2 = arith.constant 0 : index
    %c0_3 = arith.constant 0 : index
    %2 = vector.load %arg1[%c1, %c0_2, %c0_3] : memref<2x64x128xf32, #tpu.memory_space<vmem>>, vector<1x64x128xf32>
    %3 = vector.shape_cast %2 : vector<1x64x128xf32> to vector<64x128xf32>
    %c0_4 = arith.constant 0 : index
    %c0_5 = arith.constant 0 : index
    %c0_6 = arith.constant 0 : index
    %4 = vector.load %arg2[%c0_4, %c0_5, %c0_6] : memref<2x1x128xf32, #tpu.memory_space<vmem>>, vector<1x1x128xf32>
    %5 = vector.shape_cast %4 : vector<1x1x128xf32> to vector<1x128xf32>
    %6 = vector.shape_cast %5 : vector<1x128xf32> to vector<1x128xf32>
    %7 = vector.broadcast %6 : vector<1x128xf32> to vector<2x128xf32>
    %c1_7 = arith.constant 1 : index
    %c0_8 = arith.constant 0 : index
    %c0_9 = arith.constant 0 : index
    %8 = vector.load %arg2[%c1_7, %c0_8, %c0_9] : memref<2x1x128xf32, #tpu.memory_space<vmem>>, vector<1x1x128xf32>
    %9 = vector.shape_cast %8 : vector<1x1x128xf32> to vector<1x128xf32>
    %10 = vector.shape_cast %9 : vector<1x128xf32> to vector<1x128xf32>
    %11 = vector.broadcast %10 : vector<1x128xf32> to vector<2x128xf32>
    %12 = tpu.iota {dimensions = array<i32: 1>} : vector<2x128xi32>
    %c64_i32 = arith.constant 64 : i32
    %13 = vector.broadcast %c64_i32 : i32 to vector<2x128xi32>
    %14 = arith.cmpi sge, %12, %13 : vector<2x128xi32>
    %c96_i32 = arith.constant 96 : i32
    %15 = vector.broadcast %c96_i32 : i32 to vector<2x128xi32>
    %16 = arith.cmpi slt, %12, %15 : vector<2x128xi32>
    %17 = arith.andi %14, %16 : vector<2x128xi1>
    %cst = arith.constant 0.000000e+00 : f32
    %18 = vector.broadcast %cst : f32 to vector<64x32xf32>
    %c0_10 = arith.constant 0 : index
    %c0_11 = arith.constant 0 : index
    %19 = vector.load %arg8[%c0_10, %c0_11] : memref<64x32xf32, #tpu.memory_space<vmem>>, vector<64x32xf32>
    tpu.vector_store %arg8[%c0_10, %c0_11], %18 {strides = array<i32>} : memref<64x32xf32, #tpu.memory_space<vmem>>, vector<64x32xf32>,
    %cst_12 = arith.constant 0.000000e+00 : f32
    %20 = vector.broadcast %cst_12 : f32 to vector<2x32xf32>
    %cst_13 = arith.constant 0.000000e+00 : f32
    %21 = vector.broadcast %cst_13 : f32 to vector<2x32xf32>
    %cst_14 = arith.constant 0.000000e+00 : f32
    %22 = vector.broadcast %cst_14 : f32 to vector<2x32xf32>
    %cst_15 = arith.constant 0.000000e+00 : f32
    %23 = vector.broadcast %cst_15 : f32 to vector<2x32xf32>
    %c0_16 = arith.constant 0 : index
    %c0_17 = arith.constant 0 : index
    %c0_18 = arith.constant 0 : index
    %24 = vector.load %arg0[%c0_16, %c0_17, %c0_18] : memref<8x2x32xf32, #tpu.memory_space<vmem>>, vector<1x2x32xf32>
    %25 = vector.shape_cast %24 : vector<1x2x32xf32> to vector<2x32xf32>
    %26 = tpu.concatenate %25, %20 in 1 : vector<2x32xf32>, vector<2x32xf32> -> vector<2x64xf32>
    %cst_19 = arith.constant dense<0.000000e+00> : vector<2x128xf32>
    %27 = tpu.matmul %26, %1, %cst_19 {dimension_numbers = #tpu.dot_dimension_numbers<[1], [0], [0], [1], [0, 0, 1, 1], [], []>} : vector<2x64xf32>, vector<64x128xf32>, vector<2x128xf32> -> vector<2x128xf32>
    %28 = arith.addf %27, %7 : vector<2x128xf32>
    %29 = math.tanh %28 : vector<2x128xf32>
    %30 = arith.negf %28 : vector<2x128xf32>
    %31 = math.exp %30 : vector<2x128xf32>
    %cst_20 = arith.constant 1.000000e+00 : f32
    %32 = vector.broadcast %cst_20 : f32 to vector<2x128xf32>
    %33 = arith.addf %32, %31 : vector<2x128xf32>
    %34 = arith.divf %32, %33 : vector<2x128xf32>
    %35 = arith.select %17, %29, %34 : vector<2x128xi1>, vector<2x128xf32>
    %36 = vector.extract_strided_slice %35 {offsets = [0, 0], sizes = [2, 32], strides = [1, 1]} : vector<2x128xf32> to vector<2x32xf32>
    %37 = vector.extract_strided_slice %35 {offsets = [0, 32], sizes = [2, 32], strides = [1, 1]} : vector<2x128xf32> to vector<2x32xf32>
    %38 = vector.extract_strided_slice %35 {offsets = [0, 64], sizes = [2, 32], strides = [1, 1]} : vector<2x128xf32> to vector<2x32xf32>
    %39 = vector.extract_strided_slice %35 {offsets = [0, 96], sizes = [2, 32], strides = [1, 1]} : vector<2x128xf32> to vector<2x32xf32>
    %40 = arith.mulf %37, %22 : vector<2x32xf32>
    %41 = arith.mulf %36, %38 : vector<2x32xf32>
    %42 = arith.addf %40, %41 : vector<2x32xf32>
    %43 = math.tanh %42 : vector<2x32xf32>
    %44 = arith.mulf %39, %43 : vector<2x32xf32>
    %45 = tpu.concatenate %44, %21 in 1 : vector<2x32xf32>, vector<2x32xf32> -> vector<2x64xf32>
    %cst_21 = arith.constant dense<0.000000e+00> : vector<2x128xf32>
    %46 = tpu.matmul %45, %3, %cst_21 {dimension_numbers = #tpu.dot_dimension_numbers<[1], [0], [0], [1], [0, 0, 1, 1], [], []>} : vector<2x64xf32>, vector<64x128xf32>, vector<2x128xf32> -> vector<2x128xf32>
    %47 = arith.addf %46, %11 : vector<2x128xf32>
    %48 = math.tanh %47 : vector<2x128xf32>
    %49 = arith.negf %47 : vector<2x128xf32>
    %50 = math.exp %49 : vector<2x128xf32>
    %cst_22 = arith.constant 1.000000e+00 : f32
    %51 = vector.broadcast %cst_22 : f32 to vector<2x128xf32>
    %52 = arith.addf %51, %50 : vector<2x128xf32>
    %53 = arith.divf %51, %52 : vector<2x128xf32>
    %54 = arith.select %17, %48, %53 : vector<2x128xi1>, vector<2x128xf32>
    %55 = vector.extract_strided_slice %54 {offsets = [0, 0], sizes = [2, 32], strides = [1, 1]} : vector<2x128xf32> to vector<2x32xf32>
    %56 = vector.extract_strided_slice %54 {offsets = [0, 32], sizes = [2, 32], strides = [1, 1]} : vector<2x128xf32> to vector<2x32xf32>
    %57 = vector.extract_strided_slice %54 {offsets = [0, 64], sizes = [2, 32], strides = [1, 1]} : vector<2x128xf32> to vector<2x32xf32>
    %58 = vector.extract_strided_slice %54 {offsets = [0, 96], sizes = [2, 32], strides = [1, 1]} : vector<2x128xf32> to vector<2x32xf32>
    %59 = arith.mulf %56, %23 : vector<2x32xf32>
    %60 = arith.mulf %55, %57 : vector<2x32xf32>
    %61 = arith.addf %59, %60 : vector<2x32xf32>
    %62 = math.tanh %61 : vector<2x32xf32>
    %63 = arith.mulf %58, %62 : vector<2x32xf32>
    %c0_23 = arith.constant 0 : index
    %c0_24 = arith.constant 0 : index
    %64 = vector.load %arg8[%c0_23, %c0_24] : memref<64x32xf32, #tpu.memory_space<vmem>>, vector<2x32xf32>
    tpu.vector_store %arg8[%c0_23, %c0_24], %63 {strides = array<i32>} : memref<64x32xf32, #tpu.memory_space<vmem>>, vector<2x32xf32>,
    %c1_25 = arith.constant 1 : index
    %c0_26 = arith.constant 0 : index
    %c0_27 = arith.constant 0 : index
    %65 = vector.load %arg0[%c1_25, %c0_26, %c0_27] : memref<8x2x32xf32, #tpu.memory_space<vmem>>, vector<1x2x32xf32>
    %66 = vector.shape_cast %65 : vector<1x2x32xf32> to vector<2x32xf32>
    %67 = tpu.concatenate %66, %44 in 1 : vector<2x32xf32>, vector<2x32xf32> -> vector<2x64xf32>
    %cst_28 = arith.constant dense<0.000000e+00> : vector<2x128xf32>
    %68 = tpu.matmul %67, %1, %cst_28 {dimension_numbers = #tpu.dot_dimension_numbers<[1], [0], [0], [1], [0, 0, 1, 1], [], []>} : vector<2x64xf32>, vector<64x128xf32>, vector<2x128xf32> -> vector<2x128xf32>
    %69 = arith.addf %68, %7 : vector<2x128xf32>
    %70 = math.tanh %69 : vector<2x128xf32>
    %71 = arith.negf %69 : vector<2x128xf32>
    %72 = math.exp %71 : vector<2x128xf32>
    %cst_29 = arith.constant 1.000000e+00 : f32
    %73 = vector.broadcast %cst_29 : f32 to vector<2x128xf32>
    %74 = arith.addf %73, %72 : vector<2x128xf32>
    %75 = arith.divf %73, %74 : vector<2x128xf32>
    %76 = arith.select %17, %70, %75 : vector<2x128xi1>, vector<2x128xf32>
    %77 = vector.extract_strided_slice %76 {offsets = [0, 0], sizes = [2, 32], strides = [1, 1]} : vector<2x128xf32> to vector<2x32xf32>
    %78 = vector.extract_strided_slice %76 {offsets = [0, 32], sizes = [2, 32], strides = [1, 1]} : vector<2x128xf32> to vector<2x32xf32>
    %79 = vector.extract_strided_slice %76 {offsets = [0, 64], sizes = [2, 32], strides = [1, 1]} : vector<2x128xf32> to vector<2x32xf32>
    %80 = vector.extract_strided_slice %76 {offsets = [0, 96], sizes = [2, 32], strides = [1, 1]} : vector<2x128xf32> to vector<2x32xf32>
    %81 = arith.mulf %78, %42 : vector<2x32xf32>
    %82 = arith.mulf %77, %79 : vector<2x32xf32>
    %83 = arith.addf %81, %82 : vector<2x32xf32>
    %84 = math.tanh %83 : vector<2x32xf32>
    %85 = arith.mulf %80, %84 : vector<2x32xf32>
    %86 = tpu.concatenate %85, %63 in 1 : vector<2x32xf32>, vector<2x32xf32> -> vector<2x64xf32>
    %cst_30 = arith.constant dense<0.000000e+00> : vector<2x128xf32>
    %87 = tpu.matmul %86, %3, %cst_30 {dimension_numbers = #tpu.dot_dimension_numbers<[1], [0], [0], [1], [0, 0, 1, 1], [], []>} : vector<2x64xf32>, vector<64x128xf32>, vector<2x128xf32> -> vector<2x128xf32>
    %88 = arith.addf %87, %11 : vector<2x128xf32>
    %89 = math.tanh %88 : vector<2x128xf32>
    %90 = arith.negf %88 : vector<2x128xf32>
    %91 = math.exp %90 : vector<2x128xf32>
    %cst_31 = arith.constant 1.000000e+00 : f32
    %92 = vector.broadcast %cst_31 : f32 to vector<2x128xf32>
    %93 = arith.addf %92, %91 : vector<2x128xf32>
    %94 = arith.divf %92, %93 : vector<2x128xf32>
    %95 = arith.select %17, %89, %94 : vector<2x128xi1>, vector<2x128xf32>
    %96 = vector.extract_strided_slice %95 {offsets = [0, 0], sizes = [2, 32], strides = [1, 1]} : vector<2x128xf32> to vector<2x32xf32>
    %97 = vector.extract_strided_slice %95 {offsets = [0, 32], sizes = [2, 32], strides = [1, 1]} : vector<2x128xf32> to vector<2x32xf32>
    %98 = vector.extract_strided_slice %95 {offsets = [0, 64], sizes = [2, 32], strides = [1, 1]} : vector<2x128xf32> to vector<2x32xf32>
    %99 = vector.extract_strided_slice %95 {offsets = [0, 96], sizes = [2, 32], strides = [1, 1]} : vector<2x128xf32> to vector<2x32xf32>
    %100 = arith.mulf %97, %61 : vector<2x32xf32>
    %101 = arith.mulf %96, %98 : vector<2x32xf32>
    %102 = arith.addf %100, %101 : vector<2x32xf32>
    %103 = math.tanh %102 : vector<2x32xf32>
    %104 = arith.mulf %99, %103 : vector<2x32xf32>
    %c8 = arith.constant 8 : index
    %c0_32 = arith.constant 0 : index
    %105 = vector.load %arg8[%c8, %c0_32] : memref<64x32xf32, #tpu.memory_space<vmem>>, vector<2x32xf32>
    tpu.vector_store %arg8[%c8, %c0_32], %104 {strides = array<i32>} : memref<64x32xf32, #tpu.memory_space<vmem>>, vector<2x32xf32>,
    %c2 = arith.constant 2 : index
    %c0_33 = arith.constant 0 : index
    %c0_34 = arith.constant 0 : index
    %106 = vector.load %arg0[%c2, %c0_33, %c0_34] : memref<8x2x32xf32, #tpu.memory_space<vmem>>, vector<1x2x32xf32>
    %107 = vector.shape_cast %106 : vector<1x2x32xf32> to vector<2x32xf32>
    %108 = tpu.concatenate %107, %85 in 1 : vector<2x32xf32>, vector<2x32xf32> -> vector<2x64xf32>
    %cst_35 = arith.constant dense<0.000000e+00> : vector<2x128xf32>
    %109 = tpu.matmul %108, %1, %cst_35 {dimension_numbers = #tpu.dot_dimension_numbers<[1], [0], [0], [1], [0, 0, 1, 1], [], []>} : vector<2x64xf32>, vector<64x128xf32>, vector<2x128xf32> -> vector<2x128xf32>
    %110 = arith.addf %109, %7 : vector<2x128xf32>
    %111 = math.tanh %110 : vector<2x128xf32>
    %112 = arith.negf %110 : vector<2x128xf32>
    %113 = math.exp %112 : vector<2x128xf32>
    %cst_36 = arith.constant 1.000000e+00 : f32
    %114 = vector.broadcast %cst_36 : f32 to vector<2x128xf32>
    %115 = arith.addf %114, %113 : vector<2x128xf32>
    %116 = arith.divf %114, %115 : vector<2x128xf32>
    %117 = arith.select %17, %111, %116 : vector<2x128xi1>, vector<2x128xf32>
    %118 = vector.extract_strided_slice %117 {offsets = [0, 0], sizes = [2, 32], strides = [1, 1]} : vector<2x128xf32> to vector<2x32xf32>
    %119 = vector.extract_strided_slice %117 {offsets = [0, 32], sizes = [2, 32], strides = [1, 1]} : vector<2x128xf32> to vector<2x32xf32>
    %120 = vector.extract_strided_slice %117 {offsets = [0, 64], sizes = [2, 32], strides = [1, 1]} : vector<2x128xf32> to vector<2x32xf32>
    %121 = vector.extract_strided_slice %117 {offsets = [0, 96], sizes = [2, 32], strides = [1, 1]} : vector<2x128xf32> to vector<2x32xf32>
    %122 = arith.mulf %119, %83 : vector<2x32xf32>
    %123 = arith.mulf %118, %120 : vector<2x32xf32>
    %124 = arith.addf %122, %123 : vector<2x32xf32>
    %125 = math.tanh %124 : vector<2x32xf32>
    %126 = arith.mulf %121, %125 : vector<2x32xf32>
    %127 = tpu.concatenate %126, %104 in 1 : vector<2x32xf32>, vector<2x32xf32> -> vector<2x64xf32>
    %cst_37 = arith.constant dense<0.000000e+00> : vector<2x128xf32>
    %128 = tpu.matmul %127, %3, %cst_37 {dimension_numbers = #tpu.dot_dimension_numbers<[1], [0], [0], [1], [0, 0, 1, 1], [], []>} : vector<2x64xf32>, vector<64x128xf32>, vector<2x128xf32> -> vector<2x128xf32>
    %129 = arith.addf %128, %11 : vector<2x128xf32>
    %130 = math.tanh %129 : vector<2x128xf32>
    %131 = arith.negf %129 : vector<2x128xf32>
    %132 = math.exp %131 : vector<2x128xf32>
    %cst_38 = arith.constant 1.000000e+00 : f32
    %133 = vector.broadcast %cst_38 : f32 to vector<2x128xf32>
    %134 = arith.addf %133, %132 : vector<2x128xf32>
    %135 = arith.divf %133, %134 : vector<2x128xf32>
    %136 = arith.select %17, %130, %135 : vector<2x128xi1>, vector<2x128xf32>
    %137 = vector.extract_strided_slice %136 {offsets = [0, 0], sizes = [2, 32], strides = [1, 1]} : vector<2x128xf32> to vector<2x32xf32>
    %138 = vector.extract_strided_slice %136 {offsets = [0, 32], sizes = [2, 32], strides = [1, 1]} : vector<2x128xf32> to vector<2x32xf32>
    %139 = vector.extract_strided_slice %136 {offsets = [0, 64], sizes = [2, 32], strides = [1, 1]} : vector<2x128xf32> to vector<2x32xf32>
    %140 = vector.extract_strided_slice %136 {offsets = [0, 96], sizes = [2, 32], strides = [1, 1]} : vector<2x128xf32> to vector<2x32xf32>
    %141 = arith.mulf %138, %102 : vector<2x32xf32>
    %142 = arith.mulf %137, %139 : vector<2x32xf32>
    %143 = arith.addf %141, %142 : vector<2x32xf32>
    %144 = math.tanh %143 : vector<2x32xf32>
    %145 = arith.mulf %140, %144 : vector<2x32xf32>
    %c16 = arith.constant 16 : index
    %c0_39 = arith.constant 0 : index
    %146 = vector.load %arg8[%c16, %c0_39] : memref<64x32xf32, #tpu.memory_space<vmem>>, vector<2x32xf32>
    tpu.vector_store %arg8[%c16, %c0_39], %145 {strides = array<i32>} : memref<64x32xf32, #tpu.memory_space<vmem>>, vector<2x32xf32>,
    %c3 = arith.constant 3 : index
    %c0_40 = arith.constant 0 : index
    %c0_41 = arith.constant 0 : index
    %147 = vector.load %arg0[%c3, %c0_40, %c0_41] : memref<8x2x32xf32, #tpu.memory_space<vmem>>, vector<1x2x32xf32>
    %148 = vector.shape_cast %147 : vector<1x2x32xf32> to vector<2x32xf32>
    %149 = tpu.concatenate %148, %126 in 1 : vector<2x32xf32>, vector<2x32xf32> -> vector<2x64xf32>
    %cst_42 = arith.constant dense<0.000000e+00> : vector<2x128xf32>
    %150 = tpu.matmul %149, %1, %cst_42 {dimension_numbers = #tpu.dot_dimension_numbers<[1], [0], [0], [1], [0, 0, 1, 1], [], []>} : vector<2x64xf32>, vector<64x128xf32>, vector<2x128xf32> -> vector<2x128xf32>
    %151 = arith.addf %150, %7 : vector<2x128xf32>
    %152 = math.tanh %151 : vector<2x128xf32>
    %153 = arith.negf %151 : vector<2x128xf32>
    %154 = math.exp %153 : vector<2x128xf32>
    %cst_43 = arith.constant 1.000000e+00 : f32
    %155 = vector.broadcast %cst_43 : f32 to vector<2x128xf32>
    %156 = arith.addf %155, %154 : vector<2x128xf32>
    %157 = arith.divf %155, %156 : vector<2x128xf32>
    %158 = arith.select %17, %152, %157 : vector<2x128xi1>, vector<2x128xf32>
    %159 = vector.extract_strided_slice %158 {offsets = [0, 0], sizes = [2, 32], strides = [1, 1]} : vector<2x128xf32> to vector<2x32xf32>
    %160 = vector.extract_strided_slice %158 {offsets = [0, 32], sizes = [2, 32], strides = [1, 1]} : vector<2x128xf32> to vector<2x32xf32>
    %161 = vector.extract_strided_slice %158 {offsets = [0, 64], sizes = [2, 32], strides = [1, 1]} : vector<2x128xf32> to vector<2x32xf32>
    %162 = vector.extract_strided_slice %158 {offsets = [0, 96], sizes = [2, 32], strides = [1, 1]} : vector<2x128xf32> to vector<2x32xf32>
    %163 = arith.mulf %160, %124 : vector<2x32xf32>
    %164 = arith.mulf %159, %161 : vector<2x32xf32>
    %165 = arith.addf %163, %164 : vector<2x32xf32>
    %166 = math.tanh %165 : vector<2x32xf32>
    %167 = arith.mulf %162, %166 : vector<2x32xf32>
    %168 = tpu.concatenate %167, %145 in 1 : vector<2x32xf32>, vector<2x32xf32> -> vector<2x64xf32>
    %cst_44 = arith.constant dense<0.000000e+00> : vector<2x128xf32>
    %169 = tpu.matmul %168, %3, %cst_44 {dimension_numbers = #tpu.dot_dimension_numbers<[1], [0], [0], [1], [0, 0, 1, 1], [], []>} : vector<2x64xf32>, vector<64x128xf32>, vector<2x128xf32> -> vector<2x128xf32>
    %170 = arith.addf %169, %11 : vector<2x128xf32>
    %171 = math.tanh %170 : vector<2x128xf32>
    %172 = arith.negf %170 : vector<2x128xf32>
    %173 = math.exp %172 : vector<2x128xf32>
    %cst_45 = arith.constant 1.000000e+00 : f32
    %174 = vector.broadcast %cst_45 : f32 to vector<2x128xf32>
    %175 = arith.addf %174, %173 : vector<2x128xf32>
    %176 = arith.divf %174, %175 : vector<2x128xf32>
    %177 = arith.select %17, %171, %176 : vector<2x128xi1>, vector<2x128xf32>
    %178 = vector.extract_strided_slice %177 {offsets = [0, 0], sizes = [2, 32], strides = [1, 1]} : vector<2x128xf32> to vector<2x32xf32>
    %179 = vector.extract_strided_slice %177 {offsets = [0, 32], sizes = [2, 32], strides = [1, 1]} : vector<2x128xf32> to vector<2x32xf32>
    %180 = vector.extract_strided_slice %177 {offsets = [0, 64], sizes = [2, 32], strides = [1, 1]} : vector<2x128xf32> to vector<2x32xf32>
    %181 = vector.extract_strided_slice %177 {offsets = [0, 96], sizes = [2, 32], strides = [1, 1]} : vector<2x128xf32> to vector<2x32xf32>
    %182 = arith.mulf %179, %143 : vector<2x32xf32>
    %183 = arith.mulf %178, %180 : vector<2x32xf32>
    %184 = arith.addf %182, %183 : vector<2x32xf32>
    %185 = math.tanh %184 : vector<2x32xf32>
    %186 = arith.mulf %181, %185 : vector<2x32xf32>
    %c24 = arith.constant 24 : index
    %c0_46 = arith.constant 0 : index
    %187 = vector.load %arg8[%c24, %c0_46] : memref<64x32xf32, #tpu.memory_space<vmem>>, vector<2x32xf32>
    tpu.vector_store %arg8[%c24, %c0_46], %186 {strides = array<i32>} : memref<64x32xf32, #tpu.memory_space<vmem>>, vector<2x32xf32>,
    %c4 = arith.constant 4 : index
    %c0_47 = arith.constant 0 : index
    %c0_48 = arith.constant 0 : index
    %188 = vector.load %arg0[%c4, %c0_47, %c0_48] : memref<8x2x32xf32, #tpu.memory_space<vmem>>, vector<1x2x32xf32>
    %189 = vector.shape_cast %188 : vector<1x2x32xf32> to vector<2x32xf32>
    %190 = tpu.concatenate %189, %167 in 1 : vector<2x32xf32>, vector<2x32xf32> -> vector<2x64xf32>
    %cst_49 = arith.constant dense<0.000000e+00> : vector<2x128xf32>
    %191 = tpu.matmul %190, %1, %cst_49 {dimension_numbers = #tpu.dot_dimension_numbers<[1], [0], [0], [1], [0, 0, 1, 1], [], []>} : vector<2x64xf32>, vector<64x128xf32>, vector<2x128xf32> -> vector<2x128xf32>
    %192 = arith.addf %191, %7 : vector<2x128xf32>
    %193 = math.tanh %192 : vector<2x128xf32>
    %194 = arith.negf %192 : vector<2x128xf32>
    %195 = math.exp %194 : vector<2x128xf32>
    %cst_50 = arith.constant 1.000000e+00 : f32
    %196 = vector.broadcast %cst_50 : f32 to vector<2x128xf32>
    %197 = arith.addf %196, %195 : vector<2x128xf32>
    %198 = arith.divf %196, %197 : vector<2x128xf32>
    %199 = arith.select %17, %193, %198 : vector<2x128xi1>, vector<2x128xf32>
    %200 = vector.extract_strided_slice %199 {offsets = [0, 0], sizes = [2, 32], strides = [1, 1]} : vector<2x128xf32> to vector<2x32xf32>
    %201 = vector.extract_strided_slice %199 {offsets = [0, 32], sizes = [2, 32], strides = [1, 1]} : vector<2x128xf32> to vector<2x32xf32>
    %202 = vector.extract_strided_slice %199 {offsets = [0, 64], sizes = [2, 32], strides = [1, 1]} : vector<2x128xf32> to vector<2x32xf32>
    %203 = vector.extract_strided_slice %199 {offsets = [0, 96], sizes = [2, 32], strides = [1, 1]} : vector<2x128xf32> to vector<2x32xf32>
    %204 = arith.mulf %201, %165 : vector<2x32xf32>
    %205 = arith.mulf %200, %202 : vector<2x32xf32>
    %206 = arith.addf %204, %205 : vector<2x32xf32>
    %207 = math.tanh %206 : vector<2x32xf32>
    %208 = arith.mulf %203, %207 : vector<2x32xf32>
    %209 = tpu.concatenate %208, %186 in 1 : vector<2x32xf32>, vector<2x32xf32> -> vector<2x64xf32>
    %cst_51 = arith.constant dense<0.000000e+00> : vector<2x128xf32>
    %210 = tpu.matmul %209, %3, %cst_51 {dimension_numbers = #tpu.dot_dimension_numbers<[1], [0], [0], [1], [0, 0, 1, 1], [], []>} : vector<2x64xf32>, vector<64x128xf32>, vector<2x128xf32> -> vector<2x128xf32>
    %211 = arith.addf %210, %11 : vector<2x128xf32>
    %212 = math.tanh %211 : vector<2x128xf32>
    %213 = arith.negf %211 : vector<2x128xf32>
    %214 = math.exp %213 : vector<2x128xf32>
    %cst_52 = arith.constant 1.000000e+00 : f32
    %215 = vector.broadcast %cst_52 : f32 to vector<2x128xf32>
    %216 = arith.addf %215, %214 : vector<2x128xf32>
    %217 = arith.divf %215, %216 : vector<2x128xf32>
    %218 = arith.select %17, %212, %217 : vector<2x128xi1>, vector<2x128xf32>
    %219 = vector.extract_strided_slice %218 {offsets = [0, 0], sizes = [2, 32], strides = [1, 1]} : vector<2x128xf32> to vector<2x32xf32>
    %220 = vector.extract_strided_slice %218 {offsets = [0, 32], sizes = [2, 32], strides = [1, 1]} : vector<2x128xf32> to vector<2x32xf32>
    %221 = vector.extract_strided_slice %218 {offsets = [0, 64], sizes = [2, 32], strides = [1, 1]} : vector<2x128xf32> to vector<2x32xf32>
    %222 = vector.extract_strided_slice %218 {offsets = [0, 96], sizes = [2, 32], strides = [1, 1]} : vector<2x128xf32> to vector<2x32xf32>
    %223 = arith.mulf %220, %184 : vector<2x32xf32>
    %224 = arith.mulf %219, %221 : vector<2x32xf32>
    %225 = arith.addf %223, %224 : vector<2x32xf32>
    %226 = math.tanh %225 : vector<2x32xf32>
    %227 = arith.mulf %222, %226 : vector<2x32xf32>
    %c32 = arith.constant 32 : index
    %c0_53 = arith.constant 0 : index
    %228 = vector.load %arg8[%c32, %c0_53] : memref<64x32xf32, #tpu.memory_space<vmem>>, vector<2x32xf32>
    tpu.vector_store %arg8[%c32, %c0_53], %227 {strides = array<i32>} : memref<64x32xf32, #tpu.memory_space<vmem>>, vector<2x32xf32>,
    %c5 = arith.constant 5 : index
    %c0_54 = arith.constant 0 : index
    %c0_55 = arith.constant 0 : index
    %229 = vector.load %arg0[%c5, %c0_54, %c0_55] : memref<8x2x32xf32, #tpu.memory_space<vmem>>, vector<1x2x32xf32>
    %230 = vector.shape_cast %229 : vector<1x2x32xf32> to vector<2x32xf32>
    %231 = tpu.concatenate %230, %208 in 1 : vector<2x32xf32>, vector<2x32xf32> -> vector<2x64xf32>
    %cst_56 = arith.constant dense<0.000000e+00> : vector<2x128xf32>
    %232 = tpu.matmul %231, %1, %cst_56 {dimension_numbers = #tpu.dot_dimension_numbers<[1], [0], [0], [1], [0, 0, 1, 1], [], []>} : vector<2x64xf32>, vector<64x128xf32>, vector<2x128xf32> -> vector<2x128xf32>
    %233 = arith.addf %232, %7 : vector<2x128xf32>
    %234 = math.tanh %233 : vector<2x128xf32>
    %235 = arith.negf %233 : vector<2x128xf32>
    %236 = math.exp %235 : vector<2x128xf32>
    %cst_57 = arith.constant 1.000000e+00 : f32
    %237 = vector.broadcast %cst_57 : f32 to vector<2x128xf32>
    %238 = arith.addf %237, %236 : vector<2x128xf32>
    %239 = arith.divf %237, %238 : vector<2x128xf32>
    %240 = arith.select %17, %234, %239 : vector<2x128xi1>, vector<2x128xf32>
    %241 = vector.extract_strided_slice %240 {offsets = [0, 0], sizes = [2, 32], strides = [1, 1]} : vector<2x128xf32> to vector<2x32xf32>
    %242 = vector.extract_strided_slice %240 {offsets = [0, 32], sizes = [2, 32], strides = [1, 1]} : vector<2x128xf32> to vector<2x32xf32>
    %243 = vector.extract_strided_slice %240 {offsets = [0, 64], sizes = [2, 32], strides = [1, 1]} : vector<2x128xf32> to vector<2x32xf32>
    %244 = vector.extract_strided_slice %240 {offsets = [0, 96], sizes = [2, 32], strides = [1, 1]} : vector<2x128xf32> to vector<2x32xf32>
    %245 = arith.mulf %242, %206 : vector<2x32xf32>
    %246 = arith.mulf %241, %243 : vector<2x32xf32>
    %247 = arith.addf %245, %246 : vector<2x32xf32>
    %248 = math.tanh %247 : vector<2x32xf32>
    %249 = arith.mulf %244, %248 : vector<2x32xf32>
    %250 = tpu.concatenate %249, %227 in 1 : vector<2x32xf32>, vector<2x32xf32> -> vector<2x64xf32>
    %cst_58 = arith.constant dense<0.000000e+00> : vector<2x128xf32>
    %251 = tpu.matmul %250, %3, %cst_58 {dimension_numbers = #tpu.dot_dimension_numbers<[1], [0], [0], [1], [0, 0, 1, 1], [], []>} : vector<2x64xf32>, vector<64x128xf32>, vector<2x128xf32> -> vector<2x128xf32>
    %252 = arith.addf %251, %11 : vector<2x128xf32>
    %253 = math.tanh %252 : vector<2x128xf32>
    %254 = arith.negf %252 : vector<2x128xf32>
    %255 = math.exp %254 : vector<2x128xf32>
    %cst_59 = arith.constant 1.000000e+00 : f32
    %256 = vector.broadcast %cst_59 : f32 to vector<2x128xf32>
    %257 = arith.addf %256, %255 : vector<2x128xf32>
    %258 = arith.divf %256, %257 : vector<2x128xf32>
    %259 = arith.select %17, %253, %258 : vector<2x128xi1>, vector<2x128xf32>
    %260 = vector.extract_strided_slice %259 {offsets = [0, 0], sizes = [2, 32], strides = [1, 1]} : vector<2x128xf32> to vector<2x32xf32>
    %261 = vector.extract_strided_slice %259 {offsets = [0, 32], sizes = [2, 32], strides = [1, 1]} : vector<2x128xf32> to vector<2x32xf32>
    %262 = vector.extract_strided_slice %259 {offsets = [0, 64], sizes = [2, 32], strides = [1, 1]} : vector<2x128xf32> to vector<2x32xf32>
    %263 = vector.extract_strided_slice %259 {offsets = [0, 96], sizes = [2, 32], strides = [1, 1]} : vector<2x128xf32> to vector<2x32xf32>
    %264 = arith.mulf %261, %225 : vector<2x32xf32>
    %265 = arith.mulf %260, %262 : vector<2x32xf32>
    %266 = arith.addf %264, %265 : vector<2x32xf32>
    %267 = math.tanh %266 : vector<2x32xf32>
    %268 = arith.mulf %263, %267 : vector<2x32xf32>
    %c40 = arith.constant 40 : index
    %c0_60 = arith.constant 0 : index
    %269 = vector.load %arg8[%c40, %c0_60] : memref<64x32xf32, #tpu.memory_space<vmem>>, vector<2x32xf32>
    tpu.vector_store %arg8[%c40, %c0_60], %268 {strides = array<i32>} : memref<64x32xf32, #tpu.memory_space<vmem>>, vector<2x32xf32>,
    %c6 = arith.constant 6 : index
    %c0_61 = arith.constant 0 : index
    %c0_62 = arith.constant 0 : index
    %270 = vector.load %arg0[%c6, %c0_61, %c0_62] : memref<8x2x32xf32, #tpu.memory_space<vmem>>, vector<1x2x32xf32>
    %271 = vector.shape_cast %270 : vector<1x2x32xf32> to vector<2x32xf32>
    %272 = tpu.concatenate %271, %249 in 1 : vector<2x32xf32>, vector<2x32xf32> -> vector<2x64xf32>
    %cst_63 = arith.constant dense<0.000000e+00> : vector<2x128xf32>
    %273 = tpu.matmul %272, %1, %cst_63 {dimension_numbers = #tpu.dot_dimension_numbers<[1], [0], [0], [1], [0, 0, 1, 1], [], []>} : vector<2x64xf32>, vector<64x128xf32>, vector<2x128xf32> -> vector<2x128xf32>
    %274 = arith.addf %273, %7 : vector<2x128xf32>
    %275 = math.tanh %274 : vector<2x128xf32>
    %276 = arith.negf %274 : vector<2x128xf32>
    %277 = math.exp %276 : vector<2x128xf32>
    %cst_64 = arith.constant 1.000000e+00 : f32
    %278 = vector.broadcast %cst_64 : f32 to vector<2x128xf32>
    %279 = arith.addf %278, %277 : vector<2x128xf32>
    %280 = arith.divf %278, %279 : vector<2x128xf32>
    %281 = arith.select %17, %275, %280 : vector<2x128xi1>, vector<2x128xf32>
    %282 = vector.extract_strided_slice %281 {offsets = [0, 0], sizes = [2, 32], strides = [1, 1]} : vector<2x128xf32> to vector<2x32xf32>
    %283 = vector.extract_strided_slice %281 {offsets = [0, 32], sizes = [2, 32], strides = [1, 1]} : vector<2x128xf32> to vector<2x32xf32>
    %284 = vector.extract_strided_slice %281 {offsets = [0, 64], sizes = [2, 32], strides = [1, 1]} : vector<2x128xf32> to vector<2x32xf32>
    %285 = vector.extract_strided_slice %281 {offsets = [0, 96], sizes = [2, 32], strides = [1, 1]} : vector<2x128xf32> to vector<2x32xf32>
    %286 = arith.mulf %283, %247 : vector<2x32xf32>
    %287 = arith.mulf %282, %284 : vector<2x32xf32>
    %288 = arith.addf %286, %287 : vector<2x32xf32>
    %289 = math.tanh %288 : vector<2x32xf32>
    %290 = arith.mulf %285, %289 : vector<2x32xf32>
    %291 = tpu.concatenate %290, %268 in 1 : vector<2x32xf32>, vector<2x32xf32> -> vector<2x64xf32>
    %cst_65 = arith.constant dense<0.000000e+00> : vector<2x128xf32>
    %292 = tpu.matmul %291, %3, %cst_65 {dimension_numbers = #tpu.dot_dimension_numbers<[1], [0], [0], [1], [0, 0, 1, 1], [], []>} : vector<2x64xf32>, vector<64x128xf32>, vector<2x128xf32> -> vector<2x128xf32>
    %293 = arith.addf %292, %11 : vector<2x128xf32>
    %294 = math.tanh %293 : vector<2x128xf32>
    %295 = arith.negf %293 : vector<2x128xf32>
    %296 = math.exp %295 : vector<2x128xf32>
    %cst_66 = arith.constant 1.000000e+00 : f32
    %297 = vector.broadcast %cst_66 : f32 to vector<2x128xf32>
    %298 = arith.addf %297, %296 : vector<2x128xf32>
    %299 = arith.divf %297, %298 : vector<2x128xf32>
    %300 = arith.select %17, %294, %299 : vector<2x128xi1>, vector<2x128xf32>
    %301 = vector.extract_strided_slice %300 {offsets = [0, 0], sizes = [2, 32], strides = [1, 1]} : vector<2x128xf32> to vector<2x32xf32>
    %302 = vector.extract_strided_slice %300 {offsets = [0, 32], sizes = [2, 32], strides = [1, 1]} : vector<2x128xf32> to vector<2x32xf32>
    %303 = vector.extract_strided_slice %300 {offsets = [0, 64], sizes = [2, 32], strides = [1, 1]} : vector<2x128xf32> to vector<2x32xf32>
    %304 = vector.extract_strided_slice %300 {offsets = [0, 96], sizes = [2, 32], strides = [1, 1]} : vector<2x128xf32> to vector<2x32xf32>
    %305 = arith.mulf %302, %266 : vector<2x32xf32>
    %306 = arith.mulf %301, %303 : vector<2x32xf32>
    %307 = arith.addf %305, %306 : vector<2x32xf32>
    %308 = math.tanh %307 : vector<2x32xf32>
    %309 = arith.mulf %304, %308 : vector<2x32xf32>
    %c48 = arith.constant 48 : index
    %c0_67 = arith.constant 0 : index
    %310 = vector.load %arg8[%c48, %c0_67] : memref<64x32xf32, #tpu.memory_space<vmem>>, vector<2x32xf32>
    tpu.vector_store %arg8[%c48, %c0_67], %309 {strides = array<i32>} : memref<64x32xf32, #tpu.memory_space<vmem>>, vector<2x32xf32>,
    %c7 = arith.constant 7 : index
    %c0_68 = arith.constant 0 : index
    %c0_69 = arith.constant 0 : index
    %311 = vector.load %arg0[%c7, %c0_68, %c0_69] : memref<8x2x32xf32, #tpu.memory_space<vmem>>, vector<1x2x32xf32>
    %312 = vector.shape_cast %311 : vector<1x2x32xf32> to vector<2x32xf32>
    %313 = tpu.concatenate %312, %290 in 1 : vector<2x32xf32>, vector<2x32xf32> -> vector<2x64xf32>
    %cst_70 = arith.constant dense<0.000000e+00> : vector<2x128xf32>
    %314 = tpu.matmul %313, %1, %cst_70 {dimension_numbers = #tpu.dot_dimension_numbers<[1], [0], [0], [1], [0, 0, 1, 1], [], []>} : vector<2x64xf32>, vector<64x128xf32>, vector<2x128xf32> -> vector<2x128xf32>
    %315 = arith.addf %314, %7 : vector<2x128xf32>
    %316 = math.tanh %315 : vector<2x128xf32>
    %317 = arith.negf %315 : vector<2x128xf32>
    %318 = math.exp %317 : vector<2x128xf32>
    %cst_71 = arith.constant 1.000000e+00 : f32
    %319 = vector.broadcast %cst_71 : f32 to vector<2x128xf32>
    %320 = arith.addf %319, %318 : vector<2x128xf32>
    %321 = arith.divf %319, %320 : vector<2x128xf32>
    %322 = arith.select %17, %316, %321 : vector<2x128xi1>, vector<2x128xf32>
    %323 = vector.extract_strided_slice %322 {offsets = [0, 0], sizes = [2, 32], strides = [1, 1]} : vector<2x128xf32> to vector<2x32xf32>
    %324 = vector.extract_strided_slice %322 {offsets = [0, 32], sizes = [2, 32], strides = [1, 1]} : vector<2x128xf32> to vector<2x32xf32>
    %325 = vector.extract_strided_slice %322 {offsets = [0, 64], sizes = [2, 32], strides = [1, 1]} : vector<2x128xf32> to vector<2x32xf32>
    %326 = vector.extract_strided_slice %322 {offsets = [0, 96], sizes = [2, 32], strides = [1, 1]} : vector<2x128xf32> to vector<2x32xf32>
    %327 = arith.mulf %324, %288 : vector<2x32xf32>
    %328 = arith.mulf %323, %325 : vector<2x32xf32>
    %329 = arith.addf %327, %328 : vector<2x32xf32>
    %330 = math.tanh %329 : vector<2x32xf32>
    %331 = arith.mulf %326, %330 : vector<2x32xf32>
    %332 = tpu.concatenate %331, %309 in 1 : vector<2x32xf32>, vector<2x32xf32> -> vector<2x64xf32>
    %cst_72 = arith.constant dense<0.000000e+00> : vector<2x128xf32>
    %333 = tpu.matmul %332, %3, %cst_72 {dimension_numbers = #tpu.dot_dimension_numbers<[1], [0], [0], [1], [0, 0, 1, 1], [], []>} : vector<2x64xf32>, vector<64x128xf32>, vector<2x128xf32> -> vector<2x128xf32>
    %334 = arith.addf %333, %11 : vector<2x128xf32>
    %335 = math.tanh %334 : vector<2x128xf32>
    %336 = arith.negf %334 : vector<2x128xf32>
    %337 = math.exp %336 : vector<2x128xf32>
    %cst_73 = arith.constant 1.000000e+00 : f32
    %338 = vector.broadcast %cst_73 : f32 to vector<2x128xf32>
    %339 = arith.addf %338, %337 : vector<2x128xf32>
    %340 = arith.divf %338, %339 : vector<2x128xf32>
    %341 = arith.select %17, %335, %340 : vector<2x128xi1>, vector<2x128xf32>
    %342 = vector.extract_strided_slice %341 {offsets = [0, 0], sizes = [2, 32], strides = [1, 1]} : vector<2x128xf32> to vector<2x32xf32>
    %343 = vector.extract_strided_slice %341 {offsets = [0, 32], sizes = [2, 32], strides = [1, 1]} : vector<2x128xf32> to vector<2x32xf32>
    %344 = vector.extract_strided_slice %341 {offsets = [0, 64], sizes = [2, 32], strides = [1, 1]} : vector<2x128xf32> to vector<2x32xf32>
    %345 = vector.extract_strided_slice %341 {offsets = [0, 96], sizes = [2, 32], strides = [1, 1]} : vector<2x128xf32> to vector<2x32xf32>
    %346 = arith.mulf %343, %307 : vector<2x32xf32>
    %347 = arith.mulf %342, %344 : vector<2x32xf32>
    %348 = arith.addf %346, %347 : vector<2x32xf32>
    %349 = math.tanh %348 : vector<2x32xf32>
    %350 = arith.mulf %345, %349 : vector<2x32xf32>
    %c56 = arith.constant 56 : index
    %c0_74 = arith.constant 0 : index
    %351 = vector.load %arg8[%c56, %c0_74] : memref<64x32xf32, #tpu.memory_space<vmem>>, vector<2x32xf32>
    tpu.vector_store %arg8[%c56, %c0_74], %350 {strides = array<i32>} : memref<64x32xf32, #tpu.memory_space<vmem>>, vector<2x32xf32>,
    %c0_75 = arith.constant 0 : index
    %c0_76 = arith.constant 0 : index
    %352 = vector.load %arg8[%c0_75, %c0_76] : memref<64x32xf32, #tpu.memory_space<vmem>>, vector<64x32xf32>
    %c0_77 = arith.constant 0 : index
    %c0_78 = arith.constant 0 : index
    %353 = vector.load %arg3[%c0_77, %c0_78] : memref<32x128xf32, #tpu.memory_space<vmem>>, vector<32x128xf32>
    %cst_79 = arith.constant dense<0.000000e+00> : vector<64x128xf32>
    %354 = tpu.matmul %352, %353, %cst_79 {dimension_numbers = #tpu.dot_dimension_numbers<[1], [0], [0], [1], [0, 0, 1, 1], [], []>} : vector<64x32xf32>, vector<32x128xf32>, vector<64x128xf32> -> vector<64x128xf32>
    %c0_80 = arith.constant 0 : index
    %c0_81 = arith.constant 0 : index
    %355 = vector.load %arg4[%c0_80, %c0_81] : memref<1x128xf32, #tpu.memory_space<vmem>>, vector<1x128xf32>
    %356 = vector.broadcast %355 : vector<1x128xf32> to vector<64x128xf32>
    %357 = arith.addf %354, %356 : vector<64x128xf32>
    %c0_82 = arith.constant 0 : index
    %c0_83 = arith.constant 0 : index
    %358 = vector.load %arg5[%c0_82, %c0_83] : memref<64x128xf32, #tpu.memory_space<vmem>>, vector<64x128xf32>
    tpu.vector_store %arg5[%c0_82, %c0_83], %357 {strides = array<i32>} : memref<64x128xf32, #tpu.memory_space<vmem>>, vector<64x128xf32>,
    %c0_84 = arith.constant 0 : index
    %c0_85 = arith.constant 0 : index
    %c0_86 = arith.constant 0 : index
    %359 = vector.load %arg6[%c0_84, %c0_85, %c0_86] : memref<2x2x32xf32, #tpu.memory_space<vmem>>, vector<1x2x32xf32>
    %360 = vector.shape_cast %359 : vector<1x2x32xf32> to vector<2x32xf32>
    %361 = vector.shape_cast %331 : vector<2x32xf32> to vector<1x2x32xf32>
    tpu.vector_store %arg6[%c0_84, %c0_85, %c0_86], %361 {strides = array<i32>} : memref<2x2x32xf32, #tpu.memory_space<vmem>>, vector<1x2x32xf32>,
    %c0_87 = arith.constant 0 : index
    %c0_88 = arith.constant 0 : index
    %c0_89 = arith.constant 0 : index
    %362 = vector.load %arg7[%c0_87, %c0_88, %c0_89] : memref<2x2x32xf32, #tpu.memory_space<vmem>>, vector<1x2x32xf32>
    %363 = vector.shape_cast %362 : vector<1x2x32xf32> to vector<2x32xf32>
    %364 = vector.shape_cast %329 : vector<2x32xf32> to vector<1x2x32xf32>
    tpu.vector_store %arg7[%c0_87, %c0_88, %c0_89], %364 {strides = array<i32>} : memref<2x2x32xf32, #tpu.memory_space<vmem>>, vector<1x2x32xf32>,
    %c1_90 = arith.constant 1 : index
    %c0_91 = arith.constant 0 : index
    %c0_92 = arith.constant 0 : index
    %365 = vector.load %arg6[%c1_90, %c0_91, %c0_92] : memref<2x2x32xf32, #tpu.memory_space<vmem>>, vector<1x2x32xf32>
    %366 = vector.shape_cast %365 : vector<1x2x32xf32> to vector<2x32xf32>
    %367 = vector.shape_cast %350 : vector<2x32xf32> to vector<1x2x32xf32>
    tpu.vector_store %arg6[%c1_90, %c0_91, %c0_92], %367 {strides = array<i32>} : memref<2x2x32xf32, #tpu.memory_space<vmem>>, vector<1x2x32xf32>,
    %c1_93 = arith.constant 1 : index
    %c0_94 = arith.constant 0 : index
    %c0_95 = arith.constant 0 : index
    %368 = vector.load %arg7[%c1_93, %c0_94, %c0_95] : memref<2x2x32xf32, #tpu.memory_space<vmem>>, vector<1x2x32xf32>
    %369 = vector.shape_cast %368 : vector<1x2x32xf32> to vector<2x32xf32>
    %370 = vector.shape_cast %348 : vector<2x32xf32> to vector<1x2x32xf32>
    tpu.vector_store %arg7[%c1_93, %c0_94, %c0_95], %370 {strides = array<i32>} : memref<2x2x32xf32, #tpu.memory_space<vmem>>, vector<1x2x32xf32>,
    return
  }
}

</mosaic_0001>

<llo_original>
// kernel: rnn_context_forward.1
$region0: #{rnn_context_forward.1}
  #allocation0 [shape = 'u32[]', space=smem, size = 0x4, offset = 0x4, fixed_abs, tag = 'smem constant byte address 0x4 - core index']
  #allocation1 [shape = 'u32[144,128]{1,0:T(1,128)}', space=vmem, size = 0x12000, scoped, tag = 'internal scratch']
  #allocation2 [shape = 'f32[64,32]{1,0:T(8,128)}', space=vmem, size = 0x8000, scoped, tag = 'scratch operand']
  %s0 = inlined_call_operand.vmem [shape: f32[8,2,32], index: 0, kind: input, shape index: {}]
  %s1 = inlined_call_operand.vmem [shape: f32[2,64,128], index: 1, kind: input, shape index: {}]
  %s2 = inlined_call_operand.vmem [shape: f32[2,1,128], index: 2, kind: input, shape index: {}]
  %s3 = inlined_call_operand.vmem [shape: f32[32,128], index: 3, kind: input, shape index: {}]
  %s4 = inlined_call_operand.vmem [shape: f32[1,128], index: 4, kind: input, shape index: {}]
  %s5 = inlined_call_operand.vmem [shape: f32[64,128], index: 5, kind: output, shape index: {0}]
  %s6 = inlined_call_operand.hbm [shape: f32[2,2,32], index: 6, kind: output, shape index: {1}]
  %s7 = inlined_call_operand.hbm [shape: f32[2,2,32], index: 7, kind: output, shape index: {2}]
  %8 = xla_tuple %s5, %s6, %s7
  %s9 = sld [smem:[#allocation0]]
  $region46: #{rnn_context_forward.1} parent=0
    _
  %s11 = ssub.s32 1, %s9
  %s12 = scalar_select 0, %s11, %s9
  $region1: #{rnn_context_forward.1} parent=0
    #allocation3 [shape = 'u8[2048]{0}', space=vmem, size = 0x800, scoped, tag = 'output window, operand 1, single buffered']
    #allocation4 [shape = 's32[1]{0}', space=sflag, size = 0x4, scoped, tag = 'scoped memory for rnn_context_forward.1']
    #allocation5 [shape = 'u8[2048]{0}', space=vmem, size = 0x800, scoped, tag = 'output window, operand 2, single buffered']
    #allocation6 [shape = 's32[1]{0}', space=sflag, size = 0x4, scoped, tag = 'scoped memory for rnn_context_forward.1']
    %13 = vsyncpa [#allocation4], 0
    %14 = vsyncpa [#allocation6], 0
    // Predicated region
    $region2: #{rnn_context_forward.1} parent=1 // pred_check
      _
    $region3: #{rnn_context_forward.1} parent=1 // pred_check_branch
      %16 = sbr.rel (0) target = $region5
    $region4: #{rnn_context_forward.1} parent=1 // pred_region
      _
    $region5: #{rnn_context_forward.1} parent=1 // pred_fallthru
      _
    // Predicated region
    $region6: #{rnn_context_forward.1} parent=1 // pred_check
      _
    $region7: #{rnn_context_forward.1} parent=1 // pred_check_branch
      %18 = sbr.rel (0) target = $region9
    $region8: #{rnn_context_forward.1} parent=1 // pred_region
      _
    $region9: #{rnn_context_forward.1} parent=1 // pred_fallthru
      _
    // Predicated region
    $region10: #{rnn_context_forward.1} parent=1 // pred_check
      _
    $region11: #{rnn_context_forward.1} parent=1 // pred_check_branch
      %20 = sbr.rel (0) target = $region13
    $region12: #{rnn_context_forward.1} parent=1 // pred_region
      _
    $region13: #{rnn_context_forward.1} parent=1 // pred_fallthru
      _
    // Predicated region
    $region14: #{rnn_context_forward.1} parent=1 // pred_check
      _
    $region15: #{rnn_context_forward.1} parent=1 // pred_check_branch
      %22 = sbr.rel (0) target = $region17
    $region16: #{rnn_context_forward.1} parent=1 // pred_region
      _
    $region17: #{rnn_context_forward.1} parent=1 // pred_fallthru
      _
    // Predicated region
    $region18: #{rnn_context_forward.1} parent=1 // pred_check
      _
    $region19: #{rnn_context_forward.1} parent=1 // pred_check_branch
      %24 = sbr.rel (0) target = $region21
    $region20: #{rnn_context_forward.1} parent=1 // pred_region
      _
    $region21: #{rnn_context_forward.1} parent=1 // pred_fallthru
      _
    %v25 = vld [vmem:[%s1] sm:$0xff]
    %v26 = vld [vmem:[%s1 + $0x8] sm:$0xff]
    %v27 = vld [vmem:[%s1 + $0x10] sm:$0xff]
    %v28 = vld [vmem:[%s1 + $0x18] sm:$0xff]
    %v29 = vld [vmem:[%s1 + $0x20] sm:$0xff]
    %v30 = vld [vmem:[%s1 + $0x28] sm:$0xff]
    %v31 = vld [vmem:[%s1 + $0x30] sm:$0xff]
    %v32 = vld [vmem:[%s1 + $0x38] sm:$0xff]
    %s33 = scalar_lea.vmem %s1, 64
    %v34 = vld [vmem:[%s33] sm:$0xff]
    %v35 = vld [vmem:[%s33 + $0x8] sm:$0xff]
    %v36 = vld [vmem:[%s33 + $0x10] sm:$0xff]
    %v37 = vld [vmem:[%s33 + $0x18] sm:$0xff]
    %v38 = vld [vmem:[%s33 + $0x20] sm:$0xff]
    %v39 = vld [vmem:[%s33 + $0x28] sm:$0xff]
    %v40 = vld [vmem:[%s33 + $0x30] sm:$0xff]
    %v41 = vld [vmem:[%s33 + $0x38] sm:$0xff]
    %v42 = vld [vmem:[%s2] sm:$0x1]
    %v44 = vlaneseq
    %v45 = vshrl.u32 %v44, 7
    %v46 = vsub.s32 0, %v45
    %v47 = vrot.slane %v42, %v46
    %s49 = scalar_lea.vmem %s2, 1
    %v50 = vld [vmem:[%s49] sm:$0x1]
    %v52 = vlaneseq
    %v53 = vshrl.u32 %v52, 7
    %v54 = vsub.s32 0, %v53
    %v55 = vrot.slane %v50, %v54
    %v57 = vlaneseq
    %v58 = vand.u32 %v57, 127
    %vm59 = vcmp.ge.s32.totalorder %v58, 64
    %vm60 = vcmp.lt.s32.totalorder %v58, 96
    %vm61 = vmand %vm59, %vm60
    %vm62 = vcmask 261120
    %63 = vst.msk [vmem:[#allocation2] sm:$0xff] %vm62, 0.0
    %64 = vst.msk [vmem:[#allocation2 + $0x8] sm:$0xff] %vm62, 0.0
    %65 = vst.msk [vmem:[#allocation2 + $0x10] sm:$0xff] %vm62, 0.0
    %66 = vst.msk [vmem:[#allocation2 + $0x18] sm:$0xff] %vm62, 0.0
    %67 = vst.msk [vmem:[#allocation2 + $0x20] sm:$0xff] %vm62, 0.0
    %68 = vst.msk [vmem:[#allocation2 + $0x28] sm:$0xff] %vm62, 0.0
    %69 = vst.msk [vmem:[#allocation2 + $0x30] sm:$0xff] %vm62, 0.0
    %70 = vst.msk [vmem:[#allocation2 + $0x38] sm:$0xff] %vm62, 0.0
    %v71 = vld [vmem:[%s0] sm:$0x3]
    %v72 = vsel %vm62, %v71, 0.0
    %vm73 = vcmask 523264
    %v75 = vsel %vm73, %v72, 0
    %77 = vmatprep.subr.mxu0 0.0
    %78 = vmatpush1.msra.mxu0 %v25
    %79 = vmatprep.subr.mxu0 0.0
    %80 = vmatpush1.msra.mxu0 %v26
    %81 = vmatprep.subr.mxu0 0.0
    %82 = vmatpush1.msra.mxu0 %v27
    %83 = vmatprep.subr.mxu0 0.0
    %84 = vmatpush1.msra.mxu0 %v28
    %85 = vmatprep.subr.mxu0 0.0
    %86 = vmatpush1.msra.mxu0 %v29
    %87 = vmatprep.subr.mxu0 0.0
    %88 = vmatpush1.msra.mxu0 %v30
    %89 = vmatprep.subr.mxu0 0.0
    %90 = vmatpush1.msra.mxu0 %v31
    %91 = vmatprep.subr.mxu0 0.0
    %92 = vmatpush1.msra.mxu0 %v32
    %93 = vmatprep.subr.mxu0 0.0
    %94 = vmatpush1.msra.mxu0 0.0
    %95 = vmatprep.subr.mxu0 0.0
    %96 = vmatpush1.msra.mxu0 0.0
    %97 = vmatprep.subr.mxu0 0.0
    %98 = vmatpush1.msra.mxu0 0.0
    %99 = vmatprep.subr.mxu0 0.0
    %100 = vmatpush1.msra.mxu0 0.0
    %101 = vmatprep.subr.mxu0 0.0
    %102 = vmatpush1.msra.mxu0 0.0
    %103 = vmatprep.subr.mxu0 0.0
    %104 = vmatpush1.msra.mxu0 0.0
    %105 = vmatprep.subr.mxu0 0.0
    %106 = vmatpush1.msra.mxu0 0.0
    %107 = vmatprep.subr.mxu0 0.0
    %108 = vmatpush1.msra.mxu0 0.0
    %109 = vmatprep.subr.mxu0 0.0
    %110 = vmatpush1.msra.mxu0 0.0
    %111 = vmatprep.subr.mxu0 0.0
    %112 = vmatpush1.msra.mxu0 0.0
    %113 = vmatprep.subr.mxu0 0.0
    %114 = vmatpush1.msra.mxu0 0.0
    %115 = vmatprep.subr.mxu0 0.0
    %116 = vmatpush1.msra.mxu0 0.0
    %117 = vmatprep.subr.mxu0 0.0
    %118 = vmatpush1.msra.mxu0 0.0
    %119 = vmatprep.subr.mxu0 0.0
    %120 = vmatpush1.msra.mxu0 0.0
    %121 = vmatprep.subr.mxu0 0.0
    %122 = vmatpush1.msra.mxu0 0.0
    %123 = vmatprep.subr.mxu0 0.0
    %124 = vmatpush1.msra.mxu0 0.0
    %125 = vmatprep.subr.mxu0 0.0
    %126 = vmatpush1.msra.mxu0 0.0
    %127 = vmatprep.subr.mxu0 0.0
    %128 = vmatpush1.msra.mxu0 0.0
    %129 = vmatprep.subr.mxu0 0.0
    %130 = vmatpush1.msra.mxu0 0.0
    %131 = vmatprep.subr.mxu0 0.0
    %132 = vmatpush1.msra.mxu0 0.0
    %133 = vmatprep.subr.mxu0 0.0
    %134 = vmatpush1.msra.mxu0 0.0
    %135 = vmatprep.subr.mxu0 0.0
    %136 = vmatpush1.msra.mxu0 0.0
    %137 = vmatprep.subr.mxu0 0.0
    %138 = vmatpush1.msra.mxu0 0.0
    %139 = vmatprep.subr.mxu0 0.0
    %140 = vmatpush1.msra.mxu0 0.0
    %141 = vmatprep.mubr.f32.mxu0 0.0
    %142 = vmatmul.mubr.f32.gmra.mrb[0].mxu0 %v75
    %v143 = vpop.f32.mrb[0].mxu0
    %v144 = vadd.f32 %v47, %v143
    %v145 = vpop.f32.mrb[0].mxu0
    %146 = vdwg.mxu0
    %v147 = vtanh.pop %v144
    %v148 = vxor.u32 %v144, 2147483648
    %v149 = vmul.f32 %v148, 1.442695
    %v150 = vpow.pop %v149
    %v151 = vadd.f32 %v150, 1.0
    %v152 = vrcp.pop %v151
    %v153 = vmul.f32 1.0, %v152
    %v154 = vsel %vm61, %v147, %v153
    %v155 = vmul.f32 %v154, 0.0
    %157 = vrot.lane.b32.xlu0 %v154, 64
    %v158 = vpop.permute.xlu0 %157
    %v160 = vmul.f32 %v154, %v158
    %162 = vrot.lane.b32.xlu0 %v160, 32
    %v163 = vpop.permute.xlu0 %162
    %v165 = vadd.f32 %v155, %v163
    %v166 = vtanh.pop %v165
    %168 = vrot.lane.b32.xlu0 %v166, 64
    %v169 = vpop.permute.xlu0 %168
    %v171 = vmul.f32 %v154, %v169
    %173 = vrot.lane.b32.xlu0 %v171, 32
    %v174 = vpop.permute.xlu0 %173
    %v176 = vsel %vm62, %v174, 0.0
    %v178 = vsel %vm73, %v176, 0
    %180 = vmatprep.subr.mxu0 0.0
    %181 = vmatpush1.msra.mxu0 %v34
    %182 = vmatprep.subr.mxu0 0.0
    %183 = vmatpush1.msra.mxu0 %v35
    %184 = vmatprep.subr.mxu0 0.0
    %185 = vmatpush1.msra.mxu0 %v36
    %186 = vmatprep.subr.mxu0 0.0
    %187 = vmatpush1.msra.mxu0 %v37
    %188 = vmatprep.subr.mxu0 0.0
    %189 = vmatpush1.msra.mxu0 %v38
    %190 = vmatprep.subr.mxu0 0.0
    %191 = vmatpush1.msra.mxu0 %v39
    %192 = vmatprep.subr.mxu0 0.0
    %193 = vmatpush1.msra.mxu0 %v40
    %194 = vmatprep.subr.mxu0 0.0
    %195 = vmatpush1.msra.mxu0 %v41
    %196 = vmatprep.subr.mxu0 0.0
    %197 = vmatpush1.msra.mxu0 0.0
    %198 = vmatprep.subr.mxu0 0.0
    %199 = vmatpush1.msra.mxu0 0.0
    %200 = vmatprep.subr.mxu0 0.0
    %201 = vmatpush1.msra.mxu0 0.0
    %202 = vmatprep.subr.mxu0 0.0
    %203 = vmatpush1.msra.mxu0 0.0
    %204 = vmatprep.subr.mxu0 0.0
    %205 = vmatpush1.msra.mxu0 0.0
    %206 = vmatprep.subr.mxu0 0.0
    %207 = vmatpush1.msra.mxu0 0.0
    %208 = vmatprep.subr.mxu0 0.0
    %209 = vmatpush1.msra.mxu0 0.0
    %210 = vmatprep.subr.mxu0 0.0
    %211 = vmatpush1.msra.mxu0 0.0
    %212 = vmatprep.subr.mxu0 0.0
    %213 = vmatpush1.msra.mxu0 0.0
    %214 = vmatprep.subr.mxu0 0.0
    %215 = vmatpush1.msra.mxu0 0.0
    %216 = vmatprep.subr.mxu0 0.0
    %217 = vmatpush1.msra.mxu0 0.0
    %218 = vmatprep.subr.mxu0 0.0
    %219 = vmatpush1.msra.mxu0 0.0
    %220 = vmatprep.subr.mxu0 0.0
    %221 = vmatpush1.msra.mxu0 0.0
    %222 = vmatprep.subr.mxu0 0.0
    %223 = vmatpush1.msra.mxu0 0.0
    %224 = vmatprep.subr.mxu0 0.0
    %225 = vmatpush1.msra.mxu0 0.0
    %226 = vmatprep.subr.mxu0 0.0
    %227 = vmatpush1.msra.mxu0 0.0
    %228 = vmatprep.subr.mxu0 0.0
    %229 = vmatpush1.msra.mxu0 0.0
    %230 = vmatprep.subr.mxu0 0.0
    %231 = vmatpush1.msra.mxu0 0.0
    %232 = vmatprep.subr.mxu0 0.0
    %233 = vmatpush1.msra.mxu0 0.0
    %234 = vmatprep.subr.mxu0 0.0
    %235 = vmatpush1.msra.mxu0 0.0
    %236 = vmatprep.subr.mxu0 0.0
    %237 = vmatpush1.msra.mxu0 0.0
    %238 = vmatprep.subr.mxu0 0.0
    %239 = vmatpush1.msra.mxu0 0.0
    %240 = vmatprep.subr.mxu0 0.0
    %241 = vmatpush1.msra.mxu0 0.0
    %242 = vmatprep.subr.mxu0 0.0
    %243 = vmatpush1.msra.mxu0 0.0
    %244 = vmatprep.mubr.f32.mxu0 0.0
    %245 = vmatmul.mubr.f32.gmra.mrb[0].mxu0 %v178
    %v246 = vpop.f32.mrb[0].mxu0
    %v247 = vadd.f32 %v55, %v246
    %v248 = vpop.f32.mrb[0].mxu0
    %249 = vdwg.mxu0
    %v250 = vtanh.pop %v247
    %v251 = vxor.u32 %v247, 2147483648
    %v252 = vmul.f32 %v251, 1.442695
    %v253 = vpow.pop %v252
    %v254 = vadd.f32 %v253, 1.0
    %v255 = vrcp.pop %v254
    %v256 = vmul.f32 1.0, %v255
    %v257 = vsel %vm61, %v250, %v256
    %v258 = vmul.f32 %v257, 0.0
    %260 = vrot.lane.b32.xlu0 %v257, 64
    %v261 = vpop.permute.xlu0 %260
    %v263 = vmul.f32 %v257, %v261
    %265 = vrot.lane.b32.xlu0 %v263, 32
    %v266 = vpop.permute.xlu0 %265
    %v268 = vadd.f32 %v258, %v266
    %v269 = vtanh.pop %v268
    %271 = vrot.lane.b32.xlu0 %v269, 64
    %v272 = vpop.permute.xlu0 %271
    %v274 = vmul.f32 %v257, %v272
    %276 = vrot.lane.b32.xlu0 %v274, 32
    %v277 = vpop.permute.xlu0 %276
    %vm279 = vcmask 254976
    %280 = vst.msk [vmem:[#allocation2] sm:$0x3] %vm279, %v277
    %s281 = scalar_lea.vmem %s0, 2
    %v282 = vld [vmem:[%s281] sm:$0x3]
    %283 = vrot.lane.b32.xlu0 %v171, 64
    %v284 = vpop.permute.xlu0 %283
    %v286 = vsel %vm62, %v282, %v284
    %v288 = vsel %vm73, %v286, 0
    %290 = vmatprep.subr.mxu0 0.0
    %291 = vmatpush1.msra.mxu0 %v25
    %292 = vmatprep.subr.mxu0 0.0
    %293 = vmatpush1.msra.mxu0 %v26
    %294 = vmatprep.subr.mxu0 0.0
    %295 = vmatpush1.msra.mxu0 %v27
    %296 = vmatprep.subr.mxu0 0.0
    %297 = vmatpush1.msra.mxu0 %v28
    %298 = vmatprep.subr.mxu0 0.0
    %299 = vmatpush1.msra.mxu0 %v29
    %300 = vmatprep.subr.mxu0 0.0
    %301 = vmatpush1.msra.mxu0 %v30
    %302 = vmatprep.subr.mxu0 0.0
    %303 = vmatpush1.msra.mxu0 %v31
    %304 = vmatprep.subr.mxu0 0.0
    %305 = vmatpush1.msra.mxu0 %v32
    %306 = vmatprep.subr.mxu0 0.0
    %307 = vmatpush1.msra.mxu0 0.0
    %308 = vmatprep.subr.mxu0 0.0
    %309 = vmatpush1.msra.mxu0 0.0
    %310 = vmatprep.subr.mxu0 0.0
    %311 = vmatpush1.msra.mxu0 0.0
    %312 = vmatprep.subr.mxu0 0.0
    %313 = vmatpush1.msra.mxu0 0.0
    %314 = vmatprep.subr.mxu0 0.0
    %315 = vmatpush1.msra.mxu0 0.0
    %316 = vmatprep.subr.mxu0 0.0
    %317 = vmatpush1.msra.mxu0 0.0
    %318 = vmatprep.subr.mxu0 0.0
    %319 = vmatpush1.msra.mxu0 0.0
    %320 = vmatprep.subr.mxu0 0.0
    %321 = vmatpush1.msra.mxu0 0.0
    %322 = vmatprep.subr.mxu0 0.0
    %323 = vmatpush1.msra.mxu0 0.0
    %324 = vmatprep.subr.mxu0 0.0
    %325 = vmatpush1.msra.mxu0 0.0
    %326 = vmatprep.subr.mxu0 0.0
    %327 = vmatpush1.msra.mxu0 0.0
    %328 = vmatprep.subr.mxu0 0.0
    %329 = vmatpush1.msra.mxu0 0.0
    %330 = vmatprep.subr.mxu0 0.0
    %331 = vmatpush1.msra.mxu0 0.0
    %332 = vmatprep.subr.mxu0 0.0
    %333 = vmatpush1.msra.mxu0 0.0
    %334 = vmatprep.subr.mxu0 0.0
    %335 = vmatpush1.msra.mxu0 0.0
    %336 = vmatprep.subr.mxu0 0.0
    %337 = vmatpush1.msra.mxu0 0.0
    %338 = vmatprep.subr.mxu0 0.0
    %339 = vmatpush1.msra.mxu0 0.0
    %340 = vmatprep.subr.mxu0 0.0
    %341 = vmatpush1.msra.mxu0 0.0
    %342 = vmatprep.subr.mxu0 0.0
    %343 = vmatpush1.msra.mxu0 0.0
    %344 = vmatprep.subr.mxu0 0.0
    %345 = vmatpush1.msra.mxu0 0.0
    %346 = vmatprep.subr.mxu0 0.0
    %347 = vmatpush1.msra.mxu0 0.0
    %348 = vmatprep.subr.mxu0 0.0
    %349 = vmatpush1.msra.mxu0 0.0
    %350 = vmatprep.subr.mxu0 0.0
    %351 = vmatpush1.msra.mxu0 0.0
    %352 = vmatprep.subr.mxu0 0.0
    %353 = vmatpush1.msra.mxu0 0.0
    %354 = vmatprep.mubr.f32.mxu0 0.0
    %355 = vmatmul.mubr.f32.gmra.mrb[0].mxu0 %v288
    %v356 = vpop.f32.mrb[0].mxu0
    %v357 = vadd.f32 %v47, %v356
    %v358 = vpop.f32.mrb[0].mxu0
    %359 = vdwg.mxu0
    %v360 = vtanh.pop %v357
    %v361 = vxor.u32 %v357, 2147483648
    %v362 = vmul.f32 %v361, 1.442695
    %v363 = vpow.pop %v362
    %v364 = vadd.f32 %v363, 1.0
    %v365 = vrcp.pop %v364
    %v366 = vmul.f32 1.0, %v365
    %v367 = vsel %vm61, %v360, %v366
    %v368 = vmul.f32 %v367, %v165
    %370 = vrot.lane.b32.xlu0 %v367, 64
    %v371 = vpop.permute.xlu0 %370
    %v373 = vmul.f32 %v367, %v371
    %375 = vrot.lane.b32.xlu0 %v373, 32
    %v376 = vpop.permute.xlu0 %375
    %v378 = vadd.f32 %v368, %v376
    %v379 = vtanh.pop %v378
    %381 = vrot.lane.b32.xlu0 %v379, 64
    %v382 = vpop.permute.xlu0 %381
    %v384 = vmul.f32 %v367, %v382
    %386 = vrot.lane.b32.xlu0 %v384, 32
    %v387 = vpop.permute.xlu0 %386
    %389 = vrot.lane.b32.xlu0 %v274, 64
    %v390 = vpop.permute.xlu0 %389
    %v392 = vsel %vm62, %v387, %v390
    %v394 = vsel %vm73, %v392, 0
    %396 = vmatprep.subr.mxu0 0.0
    %397 = vmatpush1.msra.mxu0 %v34
    %398 = vmatprep.subr.mxu0 0.0
    %399 = vmatpush1.msra.mxu0 %v35
    %400 = vmatprep.subr.mxu0 0.0
    %401 = vmatpush1.msra.mxu0 %v36
    %402 = vmatprep.subr.mxu0 0.0
    %403 = vmatpush1.msra.mxu0 %v37
    %404 = vmatprep.subr.mxu0 0.0
    %405 = vmatpush1.msra.mxu0 %v38
    %406 = vmatprep.subr.mxu0 0.0
    %407 = vmatpush1.msra.mxu0 %v39
    %408 = vmatprep.subr.mxu0 0.0
    %409 = vmatpush1.msra.mxu0 %v40
    %410 = vmatprep.subr.mxu0 0.0
    %411 = vmatpush1.msra.mxu0 %v41
    %412 = vmatprep.subr.mxu0 0.0
    %413 = vmatpush1.msra.mxu0 0.0
    %414 = vmatprep.subr.mxu0 0.0
    %415 = vmatpush1.msra.mxu0 0.0
    %416 = vmatprep.subr.mxu0 0.0
    %417 = vmatpush1.msra.mxu0 0.0
    %418 = vmatprep.subr.mxu0 0.0
    %419 = vmatpush1.msra.mxu0 0.0
    %420 = vmatprep.subr.mxu0 0.0
    %421 = vmatpush1.msra.mxu0 0.0
    %422 = vmatprep.subr.mxu0 0.0
    %423 = vmatpush1.msra.mxu0 0.0
    %424 = vmatprep.subr.mxu0 0.0
    %425 = vmatpush1.msra.mxu0 0.0
    %426 = vmatprep.subr.mxu0 0.0
    %427 = vmatpush1.msra.mxu0 0.0
    %428 = vmatprep.subr.mxu0 0.0
    %429 = vmatpush1.msra.mxu0 0.0
    %430 = vmatprep.subr.mxu0 0.0
    %431 = vmatpush1.msra.mxu0 0.0
    %432 = vmatprep.subr.mxu0 0.0
    %433 = vmatpush1.msra.mxu0 0.0
    %434 = vmatprep.subr.mxu0 0.0
    %435 = vmatpush1.msra.mxu0 0.0
    %436 = vmatprep.subr.mxu0 0.0
    %437 = vmatpush1.msra.mxu0 0.0
    %438 = vmatprep.subr.mxu0 0.0
    %439 = vmatpush1.msra.mxu0 0.0
    %440 = vmatprep.subr.mxu0 0.0
    %441 = vmatpush1.msra.mxu0 0.0
    %442 = vmatprep.subr.mxu0 0.0
    %443 = vmatpush1.msra.mxu0 0.0
    %444 = vmatprep.subr.mxu0 0.0
    %445 = vmatpush1.msra.mxu0 0.0
    %446 = vmatprep.subr.mxu0 0.0
    %447 = vmatpush1.msra.mxu0 0.0
    %448 = vmatprep.subr.mxu0 0.0
    %449 = vmatpush1.msra.mxu0 0.0
    %450 = vmatprep.subr.mxu0 0.0
    %451 = vmatpush1.msra.mxu0 0.0
    %452 = vmatprep.subr.mxu0 0.0
    %453 = vmatpush1.msra.mxu0 0.0
    %454 = vmatprep.subr.mxu0 0.0
    %455 = vmatpush1.msra.mxu0 0.0
    %456 = vmatprep.subr.mxu0 0.0
    %457 = vmatpush1.msra.mxu0 0.0
    %458 = vmatprep.subr.mxu0 0.0
    %459 = vmatpush1.msra.mxu0 0.0
    %460 = vmatprep.mubr.f32.mxu0 0.0
    %461 = vmatmul.mubr.f32.gmra.mrb[0].mxu0 %v394
    %v462 = vpop.f32.mrb[0].mxu0
    %v463 = vadd.f32 %v55, %v462
    %v464 = vpop.f32.mrb[0].mxu0
    %465 = vdwg.mxu0
    %v466 = vtanh.pop %v463
    %v467 = vxor.u32 %v463, 2147483648
    %v468 = vmul.f32 %v467, 1.442695
    %v469 = vpow.pop %v468
    %v470 = vadd.f32 %v469, 1.0
    %v471 = vrcp.pop %v470
    %v472 = vmul.f32 1.0, %v471
    %v473 = vsel %vm61, %v466, %v472
    %v474 = vmul.f32 %v473, %v268
    %476 = vrot.lane.b32.xlu0 %v473, 64
    %v477 = vpop.permute.xlu0 %476
    %v479 = vmul.f32 %v473, %v477
    %481 = vrot.lane.b32.xlu0 %v479, 32
    %v482 = vpop.permute.xlu0 %481
    %v484 = vadd.f32 %v474, %v482
    %v485 = vtanh.pop %v484
    %487 = vrot.lane.b32.xlu0 %v485, 64
    %v488 = vpop.permute.xlu0 %487
    %v490 = vmul.f32 %v473, %v488
    %492 = vrot.lane.b32.xlu0 %v490, 32
    %v493 = vpop.permute.xlu0 %492
    %495 = vst.msk [vmem:[#allocation2 + $0x8] sm:$0x3] %vm279, %v493
    %s496 = scalar_lea.vmem %s0, 4
    %v497 = vld [vmem:[%s496] sm:$0x3]
    %498 = vrot.lane.b32.xlu0 %v384, 64
    %v499 = vpop.permute.xlu0 %498
    %v501 = vsel %vm62, %v497, %v499
    %v503 = vsel %vm73, %v501, 0
    %505 = vmatprep.subr.mxu0 0.0
    %506 = vmatpush1.msra.mxu0 %v25
    %507 = vmatprep.subr.mxu0 0.0
    %508 = vmatpush1.msra.mxu0 %v26
    %509 = vmatprep.subr.mxu0 0.0
    %510 = vmatpush1.msra.mxu0 %v27
    %511 = vmatprep.subr.mxu0 0.0
    %512 = vmatpush1.msra.mxu0 %v28
    %513 = vmatprep.subr.mxu0 0.0
    %514 = vmatpush1.msra.mxu0 %v29
    %515 = vmatprep.subr.mxu0 0.0
    %516 = vmatpush1.msra.mxu0 %v30
    %517 = vmatprep.subr.mxu0 0.0
    %518 = vmatpush1.msra.mxu0 %v31
    %519 = vmatprep.subr.mxu0 0.0
    %520 = vmatpush1.msra.mxu0 %v32
    %521 = vmatprep.subr.mxu0 0.0
    %522 = vmatpush1.msra.mxu0 0.0
    %523 = vmatprep.subr.mxu0 0.0
    %524 = vmatpush1.msra.mxu0 0.0
    %525 = vmatprep.subr.mxu0 0.0
    %526 = vmatpush1.msra.mxu0 0.0
    %527 = vmatprep.subr.mxu0 0.0
    %528 = vmatpush1.msra.mxu0 0.0
    %529 = vmatprep.subr.mxu0 0.0
    %530 = vmatpush1.msra.mxu0 0.0
    %531 = vmatprep.subr.mxu0 0.0
    %532 = vmatpush1.msra.mxu0 0.0
    %533 = vmatprep.subr.mxu0 0.0
    %534 = vmatpush1.msra.mxu0 0.0
    %535 = vmatprep.subr.mxu0 0.0
    %536 = vmatpush1.msra.mxu0 0.0
    %537 = vmatprep.subr.mxu0 0.0
    %538 = vmatpush1.msra.mxu0 0.0
    %539 = vmatprep.subr.mxu0 0.0
    %540 = vmatpush1.msra.mxu0 0.0
    %541 = vmatprep.subr.mxu0 0.0
    %542 = vmatpush1.msra.mxu0 0.0
    %543 = vmatprep.subr.mxu0 0.0
    %544 = vmatpush1.msra.mxu0 0.0
    %545 = vmatprep.subr.mxu0 0.0
    %546 = vmatpush1.msra.mxu0 0.0
    %547 = vmatprep.subr.mxu0 0.0
    %548 = vmatpush1.msra.mxu0 0.0
    %549 = vmatprep.subr.mxu0 0.0
    %550 = vmatpush1.msra.mxu0 0.0
    %551 = vmatprep.subr.mxu0 0.0
    %552 = vmatpush1.msra.mxu0 0.0
    %553 = vmatprep.subr.mxu0 0.0
    %554 = vmatpush1.msra.mxu0 0.0
    %555 = vmatprep.subr.mxu0 0.0
    %556 = vmatpush1.msra.mxu0 0.0
    %557 = vmatprep.subr.mxu0 0.0
    %558 = vmatpush1.msra.mxu0 0.0
    %559 = vmatprep.subr.mxu0 0.0
    %560 = vmatpush1.msra.mxu0 0.0
    %561 = vmatprep.subr.mxu0 0.0
    %562 = vmatpush1.msra.mxu0 0.0
    %563 = vmatprep.subr.mxu0 0.0
    %564 = vmatpush1.msra.mxu0 0.0
    %565 = vmatprep.subr.mxu0 0.0
    %566 = vmatpush1.msra.mxu0 0.0
    %567 = vmatprep.subr.mxu0 0.0
    %568 = vmatpush1.msra.mxu0 0.0
    %569 = vmatprep.mubr.f32.mxu0 0.0
    %570 = vmatmul.mubr.f32.gmra.mrb[0].mxu0 %v503
    %v571 = vpop.f32.mrb[0].mxu0
    %v572 = vadd.f32 %v47, %v571
    %v573 = vpop.f32.mrb[0].mxu0
    %574 = vdwg.mxu0
    %v575 = vtanh.pop %v572
    %v576 = vxor.u32 %v572, 2147483648
    %v577 = vmul.f32 %v576, 1.442695
    %v578 = vpow.pop %v577
    %v579 = vadd.f32 %v578, 1.0
    %v580 = vrcp.pop %v579
    %v581 = vmul.f32 1.0, %v580
    %v582 = vsel %vm61, %v575, %v581
    %v583 = vmul.f32 %v582, %v378
    %585 = vrot.lane.b32.xlu0 %v582, 64
    %v586 = vpop.permute.xlu0 %585
    %v588 = vmul.f32 %v582, %v586
    %590 = vrot.lane.b32.xlu0 %v588, 32
    %v591 = vpop.permute.xlu0 %590
    %v593 = vadd.f32 %v583, %v591
    %v594 = vtanh.pop %v593
    %596 = vrot.lane.b32.xlu0 %v594, 64
    %v597 = vpop.permute.xlu0 %596
    %v599 = vmul.f32 %v582, %v597
    %601 = vrot.lane.b32.xlu0 %v599, 32
    %v602 = vpop.permute.xlu0 %601
    %604 = vrot.lane.b32.xlu0 %v490, 64
    %v605 = vpop.permute.xlu0 %604
    %v607 = vsel %vm62, %v602, %v605
    %v609 = vsel %vm73, %v607, 0
    %611 = vmatprep.subr.mxu0 0.0
    %612 = vmatpush1.msra.mxu0 %v34
    %613 = vmatprep.subr.mxu0 0.0
    %614 = vmatpush1.msra.mxu0 %v35
    %615 = vmatprep.subr.mxu0 0.0
    %616 = vmatpush1.msra.mxu0 %v36
    %617 = vmatprep.subr.mxu0 0.0
    %618 = vmatpush1.msra.mxu0 %v37
    %619 = vmatprep.subr.mxu0 0.0
    %620 = vmatpush1.msra.mxu0 %v38
    %621 = vmatprep.subr.mxu0 0.0
    %622 = vmatpush1.msra.mxu0 %v39
    %623 = vmatprep.subr.mxu0 0.0
    %624 = vmatpush1.msra.mxu0 %v40
    %625 = vmatprep.subr.mxu0 0.0
    %626 = vmatpush1.msra.mxu0 %v41
    %627 = vmatprep.subr.mxu0 0.0
    %628 = vmatpush1.msra.mxu0 0.0
    %629 = vmatprep.subr.mxu0 0.0
    %630 = vmatpush1.msra.mxu0 0.0
    %631 = vmatprep.subr.mxu0 0.0
    %632 = vmatpush1.msra.mxu0 0.0
    %633 = vmatprep.subr.mxu0 0.0
    %634 = vmatpush1.msra.mxu0 0.0
    %635 = vmatprep.subr.mxu0 0.0
    %636 = vmatpush1.msra.mxu0 0.0
    %637 = vmatprep.subr.mxu0 0.0
    %638 = vmatpush1.msra.mxu0 0.0
    %639 = vmatprep.subr.mxu0 0.0
    %640 = vmatpush1.msra.mxu0 0.0
    %641 = vmatprep.subr.mxu0 0.0
    %642 = vmatpush1.msra.mxu0 0.0
    %643 = vmatprep.subr.mxu0 0.0
    %644 = vmatpush1.msra.mxu0 0.0
    %645 = vmatprep.subr.mxu0 0.0
    %646 = vmatpush1.msra.mxu0 0.0
    %647 = vmatprep.subr.mxu0 0.0
    %648 = vmatpush1.msra.mxu0 0.0
    %649 = vmatprep.subr.mxu0 0.0
    %650 = vmatpush1.msra.mxu0 0.0
    %651 = vmatprep.subr.mxu0 0.0
    %652 = vmatpush1.msra.mxu0 0.0
    %653 = vmatprep.subr.mxu0 0.0
    %654 = vmatpush1.msra.mxu0 0.0
    %655 = vmatprep.subr.mxu0 0.0
    %656 = vmatpush1.msra.mxu0 0.0
    %657 = vmatprep.subr.mxu0 0.0
    %658 = vmatpush1.msra.mxu0 0.0
    %659 = vmatprep.subr.mxu0 0.0
    %660 = vmatpush1.msra.mxu0 0.0
    %661 = vmatprep.subr.mxu0 0.0
    %662 = vmatpush1.msra.mxu0 0.0
    %663 = vmatprep.subr.mxu0 0.0
    %664 = vmatpush1.msra.mxu0 0.0
    %665 = vmatprep.subr.mxu0 0.0
    %666 = vmatpush1.msra.mxu0 0.0
    %667 = vmatprep.subr.mxu0 0.0
    %668 = vmatpush1.msra.mxu0 0.0
    %669 = vmatprep.subr.mxu0 0.0
    %670 = vmatpush1.msra.mxu0 0.0
    %671 = vmatprep.subr.mxu0 0.0
    %672 = vmatpush1.msra.mxu0 0.0
    %673 = vmatprep.subr.mxu0 0.0
    %674 = vmatpush1.msra.mxu0 0.0
    %675 = vmatprep.mubr.f32.mxu0 0.0
    %676 = vmatmul.mubr.f32.gmra.mrb[0].mxu0 %v609
    %v677 = vpop.f32.mrb[0].mxu0
    %v678 = vadd.f32 %v55, %v677
    %v679 = vpop.f32.mrb[0].mxu0
    %680 = vdwg.mxu0
    %v681 = vtanh.pop %v678
    %v682 = vxor.u32 %v678, 2147483648
    %v683 = vmul.f32 %v682, 1.442695
    %v684 = vpow.pop %v683
    %v685 = vadd.f32 %v684, 1.0
    %v686 = vrcp.pop %v685
    %v687 = vmul.f32 1.0, %v686
    %v688 = vsel %vm61, %v681, %v687
    %v689 = vmul.f32 %v688, %v484
    %691 = vrot.lane.b32.xlu0 %v688, 64
    %v692 = vpop.permute.xlu0 %691
    %v694 = vmul.f32 %v688, %v692
    %696 = vrot.lane.b32.xlu0 %v694, 32
    %v697 = vpop.permute.xlu0 %696
    %v699 = vadd.f32 %v689, %v697
    %v700 = vtanh.pop %v699
    %702 = vrot.lane.b32.xlu0 %v700, 64
    %v703 = vpop.permute.xlu0 %702
    %v705 = vmul.f32 %v688, %v703
    %707 = vrot.lane.b32.xlu0 %v705, 32
    %v708 = vpop.permute.xlu0 %707
    %710 = vst.msk [vmem:[#allocation2 + $0x10] sm:$0x3] %vm279, %v708
    %s711 = scalar_lea.vmem %s0, 6
    %v712 = vld [vmem:[%s711] sm:$0x3]
    %713 = vrot.lane.b32.xlu0 %v599, 64
    %v714 = vpop.permute.xlu0 %713
    %v716 = vsel %vm62, %v712, %v714
    %v718 = vsel %vm73, %v716, 0
    %720 = vmatprep.subr.mxu0 0.0
    %721 = vmatpush1.msra.mxu0 %v25
    %722 = vmatprep.subr.mxu0 0.0
    %723 = vmatpush1.msra.mxu0 %v26
    %724 = vmatprep.subr.mxu0 0.0
    %725 = vmatpush1.msra.mxu0 %v27
    %726 = vmatprep.subr.mxu0 0.0
    %727 = vmatpush1.msra.mxu0 %v28
    %728 = vmatprep.subr.mxu0 0.0
    %729 = vmatpush1.msra.mxu0 %v29
    %730 = vmatprep.subr.mxu0 0.0
    %731 = vmatpush1.msra.mxu0 %v30
    %732 = vmatprep.subr.mxu0 0.0
    %733 = vmatpush1.msra.mxu0 %v31
    %734 = vmatprep.subr.mxu0 0.0
    %735 = vmatpush1.msra.mxu0 %v32
    %736 = vmatprep.subr.mxu0 0.0
    %737 = vmatpush1.msra.mxu0 0.0
    %738 = vmatprep.subr.mxu0 0.0
    %739 = vmatpush1.msra.mxu0 0.0
    %740 = vmatprep.subr.mxu0 0.0
    %741 = vmatpush1.msra.mxu0 0.0
    %742 = vmatprep.subr.mxu0 0.0
    %743 = vmatpush1.msra.mxu0 0.0
    %744 = vmatprep.subr.mxu0 0.0
    %745 = vmatpush1.msra.mxu0 0.0
    %746 = vmatprep.subr.mxu0 0.0
    %747 = vmatpush1.msra.mxu0 0.0
    %748 = vmatprep.subr.mxu0 0.0
    %749 = vmatpush1.msra.mxu0 0.0
    %750 = vmatprep.subr.mxu0 0.0
    %751 = vmatpush1.msra.mxu0 0.0
    %752 = vmatprep.subr.mxu0 0.0
    %753 = vmatpush1.msra.mxu0 0.0
    %754 = vmatprep.subr.mxu0 0.0
    %755 = vmatpush1.msra.mxu0 0.0
    %756 = vmatprep.subr.mxu0 0.0
    %757 = vmatpush1.msra.mxu0 0.0
    %758 = vmatprep.subr.mxu0 0.0
    %759 = vmatpush1.msra.mxu0 0.0
    %760 = vmatprep.subr.mxu0 0.0
    %761 = vmatpush1.msra.mxu0 0.0
    %762 = vmatprep.subr.mxu0 0.0
    %763 = vmatpush1.msra.mxu0 0.0
    %764 = vmatprep.subr.mxu0 0.0
    %765 = vmatpush1.msra.mxu0 0.0
    %766 = vmatprep.subr.mxu0 0.0
    %767 = vmatpush1.msra.mxu0 0.0
    %768 = vmatprep.subr.mxu0 0.0
    %769 = vmatpush1.msra.mxu0 0.0
    %770 = vmatprep.subr.mxu0 0.0
    %771 = vmatpush1.msra.mxu0 0.0
    %772 = vmatprep.subr.mxu0 0.0
    %773 = vmatpush1.msra.mxu0 0.0
    %774 = vmatprep.subr.mxu0 0.0
    %775 = vmatpush1.msra.mxu0 0.0
    %776 = vmatprep.subr.mxu0 0.0
    %777 = vmatpush1.msra.mxu0 0.0
    %778 = vmatprep.subr.mxu0 0.0
    %779 = vmatpush1.msra.mxu0 0.0
    %780 = vmatprep.subr.mxu0 0.0
    %781 = vmatpush1.msra.mxu0 0.0
    %782 = vmatprep.subr.mxu0 0.0
    %783 = vmatpush1.msra.mxu0 0.0
    %784 = vmatprep.mubr.f32.mxu0 0.0
    %785 = vmatmul.mubr.f32.gmra.mrb[0].mxu0 %v718
    %v786 = vpop.f32.mrb[0].mxu0
    %v787 = vadd.f32 %v47, %v786
    %v788 = vpop.f32.mrb[0].mxu0
    %789 = vdwg.mxu0
    %v790 = vtanh.pop %v787
    %v791 = vxor.u32 %v787, 2147483648
    %v792 = vmul.f32 %v791, 1.442695
    %v793 = vpow.pop %v792
    %v794 = vadd.f32 %v793, 1.0
    %v795 = vrcp.pop %v794
    %v796 = vmul.f32 1.0, %v795
    %v797 = vsel %vm61, %v790, %v796
    %v798 = vmul.f32 %v797, %v593
    %800 = vrot.lane.b32.xlu0 %v797, 64
    %v801 = vpop.permute.xlu0 %800
    %v803 = vmul.f32 %v797, %v801
    %805 = vrot.lane.b32.xlu0 %v803, 32
    %v806 = vpop.permute.xlu0 %805
    %v808 = vadd.f32 %v798, %v806
    %v809 = vtanh.pop %v808
    %811 = vrot.lane.b32.xlu0 %v809, 64
    %v812 = vpop.permute.xlu0 %811
    %v814 = vmul.f32 %v797, %v812
    %816 = vrot.lane.b32.xlu0 %v814, 32
    %v817 = vpop.permute.xlu0 %816
    %819 = vrot.lane.b32.xlu0 %v705, 64
    %v820 = vpop.permute.xlu0 %819
    %v822 = vsel %vm62, %v817, %v820
    %v824 = vsel %vm73, %v822, 0
    %826 = vmatprep.subr.mxu0 0.0
    %827 = vmatpush1.msra.mxu0 %v34
    %828 = vmatprep.subr.mxu0 0.0
    %829 = vmatpush1.msra.mxu0 %v35
    %830 = vmatprep.subr.mxu0 0.0
    %831 = vmatpush1.msra.mxu0 %v36
    %832 = vmatprep.subr.mxu0 0.0
    %833 = vmatpush1.msra.mxu0 %v37
    %834 = vmatprep.subr.mxu0 0.0
    %835 = vmatpush1.msra.mxu0 %v38
    %836 = vmatprep.subr.mxu0 0.0
    %837 = vmatpush1.msra.mxu0 %v39
    %838 = vmatprep.subr.mxu0 0.0
    %839 = vmatpush1.msra.mxu0 %v40
    %840 = vmatprep.subr.mxu0 0.0
    %841 = vmatpush1.msra.mxu0 %v41
    %842 = vmatprep.subr.mxu0 0.0
    %843 = vmatpush1.msra.mxu0 0.0
    %844 = vmatprep.subr.mxu0 0.0
    %845 = vmatpush1.msra.mxu0 0.0
    %846 = vmatprep.subr.mxu0 0.0
    %847 = vmatpush1.msra.mxu0 0.0
    %848 = vmatprep.subr.mxu0 0.0
    %849 = vmatpush1.msra.mxu0 0.0
    %850 = vmatprep.subr.mxu0 0.0
    %851 = vmatpush1.msra.mxu0 0.0
    %852 = vmatprep.subr.mxu0 0.0
    %853 = vmatpush1.msra.mxu0 0.0
    %854 = vmatprep.subr.mxu0 0.0
    %855 = vmatpush1.msra.mxu0 0.0
    %856 = vmatprep.subr.mxu0 0.0
    %857 = vmatpush1.msra.mxu0 0.0
    %858 = vmatprep.subr.mxu0 0.0
    %859 = vmatpush1.msra.mxu0 0.0
    %860 = vmatprep.subr.mxu0 0.0
    %861 = vmatpush1.msra.mxu0 0.0
    %862 = vmatprep.subr.mxu0 0.0
    %863 = vmatpush1.msra.mxu0 0.0
    %864 = vmatprep.subr.mxu0 0.0
    %865 = vmatpush1.msra.mxu0 0.0
    %866 = vmatprep.subr.mxu0 0.0
    %867 = vmatpush1.msra.mxu0 0.0
    %868 = vmatprep.subr.mxu0 0.0
    %869 = vmatpush1.msra.mxu0 0.0
    %870 = vmatprep.subr.mxu0 0.0
    %871 = vmatpush1.msra.mxu0 0.0
    %872 = vmatprep.subr.mxu0 0.0
    %873 = vmatpush1.msra.mxu0 0.0
    %874 = vmatprep.subr.mxu0 0.0
    %875 = vmatpush1.msra.mxu0 0.0
    %876 = vmatprep.subr.mxu0 0.0
    %877 = vmatpush1.msra.mxu0 0.0
    %878 = vmatprep.subr.mxu0 0.0
    %879 = vmatpush1.msra.mxu0 0.0
    %880 = vmatprep.subr.mxu0 0.0
    %881 = vmatpush1.msra.mxu0 0.0
    %882 = vmatprep.subr.mxu0 0.0
    %883 = vmatpush1.msra.mxu0 0.0
    %884 = vmatprep.subr.mxu0 0.0
    %885 = vmatpush1.msra.mxu0 0.0
    %886 = vmatprep.subr.mxu0 0.0
    %887 = vmatpush1.msra.mxu0 0.0
    %888 = vmatprep.subr.mxu0 0.0
    %889 = vmatpush1.msra.mxu0 0.0
    %890 = vmatprep.mubr.f32.mxu0 0.0
    %891 = vmatmul.mubr.f32.gmra.mrb[0].mxu0 %v824
    %v892 = vpop.f32.mrb[0].mxu0
    %v893 = vadd.f32 %v55, %v892
    %v894 = vpop.f32.mrb[0].mxu0
    %895 = vdwg.mxu0
    %v896 = vtanh.pop %v893
    %v897 = vxor.u32 %v893, 2147483648
    %v898 = vmul.f32 %v897, 1.442695
    %v899 = vpow.pop %v898
    %v900 = vadd.f32 %v899, 1.0
    %v901 = vrcp.pop %v900
    %v902 = vmul.f32 1.0, %v901
    %v903 = vsel %vm61, %v896, %v902
    %v904 = vmul.f32 %v903, %v699
    %906 = vrot.lane.b32.xlu0 %v903, 64
    %v907 = vpop.permute.xlu0 %906
    %v909 = vmul.f32 %v903, %v907
    %911 = vrot.lane.b32.xlu0 %v909, 32
    %v912 = vpop.permute.xlu0 %911
    %v914 = vadd.f32 %v904, %v912
    %v915 = vtanh.pop %v914
    %917 = vrot.lane.b32.xlu0 %v915, 64
    %v918 = vpop.permute.xlu0 %917
    %v920 = vmul.f32 %v903, %v918
    %922 = vrot.lane.b32.xlu0 %v920, 32
    %v923 = vpop.permute.xlu0 %922
    %925 = vst.msk [vmem:[#allocation2 + $0x18] sm:$0x3] %vm279, %v923
    %s926 = scalar_lea.vmem %s0, 8
    %v927 = vld [vmem:[%s926] sm:$0x3]
    %928 = vrot.lane.b32.xlu0 %v814, 64
    %v929 = vpop.permute.xlu0 %928
    %v931 = vsel %vm62, %v927, %v929
    %v933 = vsel %vm73, %v931, 0
    %935 = vmatprep.subr.mxu0 0.0
    %936 = vmatpush1.msra.mxu0 %v25
    %937 = vmatprep.subr.mxu0 0.0
    %938 = vmatpush1.msra.mxu0 %v26
    %939 = vmatprep.subr.mxu0 0.0
    %940 = vmatpush1.msra.mxu0 %v27
    %941 = vmatprep.subr.mxu0 0.0
    %942 = vmatpush1.msra.mxu0 %v28
    %943 = vmatprep.subr.mxu0 0.0
    %944 = vmatpush1.msra.mxu0 %v29
    %945 = vmatprep.subr.mxu0 0.0
    %946 = vmatpush1.msra.mxu0 %v30
    %947 = vmatprep.subr.mxu0 0.0
    %948 = vmatpush1.msra.mxu0 %v31
    %949 = vmatprep.subr.mxu0 0.0
    %950 = vmatpush1.msra.mxu0 %v32
    %951 = vmatprep.subr.mxu0 0.0
    %952 = vmatpush1.msra.mxu0 0.0
    %953 = vmatprep.subr.mxu0 0.0
    %954 = vmatpush1.msra.mxu0 0.0
    %955 = vmatprep.subr.mxu0 0.0
    %956 = vmatpush1.msra.mxu0 0.0
    %957 = vmatprep.subr.mxu0 0.0
    %958 = vmatpush1.msra.mxu0 0.0
    %959 = vmatprep.subr.mxu0 0.0
    %960 = vmatpush1.msra.mxu0 0.0
    %961 = vmatprep.subr.mxu0 0.0
    %962 = vmatpush1.msra.mxu0 0.0
    %963 = vmatprep.subr.mxu0 0.0
    %964 = vmatpush1.msra.mxu0 0.0
    %965 = vmatprep.subr.mxu0 0.0
    %966 = vmatpush1.msra.mxu0 0.0
    %967 = vmatprep.subr.mxu0 0.0
    %968 = vmatpush1.msra.mxu0 0.0
    %969 = vmatprep.subr.mxu0 0.0
    %970 = vmatpush1.msra.mxu0 0.0
    %971 = vmatprep.subr.mxu0 0.0
    %972 = vmatpush1.msra.mxu0 0.0
    %973 = vmatprep.subr.mxu0 0.0
    %974 = vmatpush1.msra.mxu0 0.0
    %975 = vmatprep.subr.mxu0 0.0
    %976 = vmatpush1.msra.mxu0 0.0
    %977 = vmatprep.subr.mxu0 0.0
    %978 = vmatpush1.msra.mxu0 0.0
    %979 = vmatprep.subr.mxu0 0.0
    %980 = vmatpush1.msra.mxu0 0.0
    %981 = vmatprep.subr.mxu0 0.0
    %982 = vmatpush1.msra.mxu0 0.0
    %983 = vmatprep.subr.mxu0 0.0
    %984 = vmatpush1.msra.mxu0 0.0
    %985 = vmatprep.subr.mxu0 0.0
    %986 = vmatpush1.msra.mxu0 0.0
    %987 = vmatprep.subr.mxu0 0.0
    %988 = vmatpush1.msra.mxu0 0.0
    %989 = vmatprep.subr.mxu0 0.0
    %990 = vmatpush1.msra.mxu0 0.0
    %991 = vmatprep.subr.mxu0 0.0
    %992 = vmatpush1.msra.mxu0 0.0
    %993 = vmatprep.subr.mxu0 0.0
    %994 = vmatpush1.msra.mxu0 0.0
    %995 = vmatprep.subr.mxu0 0.0
    %996 = vmatpush1.msra.mxu0 0.0
    %997 = vmatprep.subr.mxu0 0.0
    %998 = vmatpush1.msra.mxu0 0.0
    %999 = vmatprep.mubr.f32.mxu0 0.0
    %1000 = vmatmul.mubr.f32.gmra.mrb[0].mxu0 %v933
    %v1001 = vpop.f32.mrb[0].mxu0
    %v1002 = vadd.f32 %v47, %v1001
    %v1003 = vpop.f32.mrb[0].mxu0
    %1004 = vdwg.mxu0
    %v1005 = vtanh.pop %v1002
    %v1006 = vxor.u32 %v1002, 2147483648
    %v1007 = vmul.f32 %v1006, 1.442695
    %v1008 = vpow.pop %v1007
    %v1009 = vadd.f32 %v1008, 1.0
    %v1010 = vrcp.pop %v1009
    %v1011 = vmul.f32 1.0, %v1010
    %v1012 = vsel %vm61, %v1005, %v1011
    %v1013 = vmul.f32 %v1012, %v808
    %1015 = vrot.lane.b32.xlu0 %v1012, 64
    %v1016 = vpop.permute.xlu0 %1015
    %v1018 = vmul.f32 %v1012, %v1016
    %1020 = vrot.lane.b32.xlu0 %v1018, 32
    %v1021 = vpop.permute.xlu0 %1020
    %v1023 = vadd.f32 %v1013, %v1021
    %v1024 = vtanh.pop %v1023
    %1026 = vrot.lane.b32.xlu0 %v1024, 64
    %v1027 = vpop.permute.xlu0 %1026
    %v1029 = vmul.f32 %v1012, %v1027
    %1031 = vrot.lane.b32.xlu0 %v1029, 32
    %v1032 = vpop.permute.xlu0 %1031
    %1034 = vrot.lane.b32.xlu0 %v920, 64
    %v1035 = vpop.permute.xlu0 %1034
    %v1037 = vsel %vm62, %v1032, %v1035
    %v1039 = vsel %vm73, %v1037, 0
    %1041 = vmatprep.subr.mxu0 0.0
    %1042 = vmatpush1.msra.mxu0 %v34
    %1043 = vmatprep.subr.mxu0 0.0
    %1044 = vmatpush1.msra.mxu0 %v35
    %1045 = vmatprep.subr.mxu0 0.0
    %1046 = vmatpush1.msra.mxu0 %v36
    %1047 = vmatprep.subr.mxu0 0.0
    %1048 = vmatpush1.msra.mxu0 %v37
    %1049 = vmatprep.subr.mxu0 0.0
    %1050 = vmatpush1.msra.mxu0 %v38
    %1051 = vmatprep.subr.mxu0 0.0
    %1052 = vmatpush1.msra.mxu0 %v39
    %1053 = vmatprep.subr.mxu0 0.0
    %1054 = vmatpush1.msra.mxu0 %v40
    %1055 = vmatprep.subr.mxu0 0.0
    %1056 = vmatpush1.msra.mxu0 %v41
    %1057 = vmatprep.subr.mxu0 0.0
    %1058 = vmatpush1.msra.mxu0 0.0
    %1059 = vmatprep.subr.mxu0 0.0
    %1060 = vmatpush1.msra.mxu0 0.0
    %1061 = vmatprep.subr.mxu0 0.0
    %1062 = vmatpush1.msra.mxu0 0.0
    %1063 = vmatprep.subr.mxu0 0.0
    %1064 = vmatpush1.msra.mxu0 0.0
    %1065 = vmatprep.subr.mxu0 0.0
    %1066 = vmatpush1.msra.mxu0 0.0
    %1067 = vmatprep.subr.mxu0 0.0
    %1068 = vmatpush1.msra.mxu0 0.0
    %1069 = vmatprep.subr.mxu0 0.0
    %1070 = vmatpush1.msra.mxu0 0.0
    %1071 = vmatprep.subr.mxu0 0.0
    %1072 = vmatpush1.msra.mxu0 0.0
    %1073 = vmatprep.subr.mxu0 0.0
    %1074 = vmatpush1.msra.mxu0 0.0
    %1075 = vmatprep.subr.mxu0 0.0
    %1076 = vmatpush1.msra.mxu0 0.0
    %1077 = vmatprep.subr.mxu0 0.0
    %1078 = vmatpush1.msra.mxu0 0.0
    %1079 = vmatprep.subr.mxu0 0.0
    %1080 = vmatpush1.msra.mxu0 0.0
    %1081 = vmatprep.subr.mxu0 0.0
    %1082 = vmatpush1.msra.mxu0 0.0
    %1083 = vmatprep.subr.mxu0 0.0
    %1084 = vmatpush1.msra.mxu0 0.0
    %1085 = vmatprep.subr.mxu0 0.0
    %1086 = vmatpush1.msra.mxu0 0.0
    %1087 = vmatprep.subr.mxu0 0.0
    %1088 = vmatpush1.msra.mxu0 0.0
    %1089 = vmatprep.subr.mxu0 0.0
    %1090 = vmatpush1.msra.mxu0 0.0
    %1091 = vmatprep.subr.mxu0 0.0
    %1092 = vmatpush1.msra.mxu0 0.0
    %1093 = vmatprep.subr.mxu0 0.0
    %1094 = vmatpush1.msra.mxu0 0.0
    %1095 = vmatprep.subr.mxu0 0.0
    %1096 = vmatpush1.msra.mxu0 0.0
    %1097 = vmatprep.subr.mxu0 0.0
    %1098 = vmatpush1.msra.mxu0 0.0
    %1099 = vmatprep.subr.mxu0 0.0
    %1100 = vmatpush1.msra.mxu0 0.0
    %1101 = vmatprep.subr.mxu0 0.0
    %1102 = vmatpush1.msra.mxu0 0.0
    %1103 = vmatprep.subr.mxu0 0.0
    %1104 = vmatpush1.msra.mxu0 0.0
    %1105 = vmatprep.mubr.f32.mxu0 0.0
    %1106 = vmatmul.mubr.f32.gmra.mrb[0].mxu0 %v1039
    %v1107 = vpop.f32.mrb[0].mxu0
    %v1108 = vadd.f32 %v55, %v1107
    %v1109 = vpop.f32.mrb[0].mxu0
    %1110 = vdwg.mxu0
    %v1111 = vtanh.pop %v1108
    %v1112 = vxor.u32 %v1108, 2147483648
    %v1113 = vmul.f32 %v1112, 1.442695
    %v1114 = vpow.pop %v1113
    %v1115 = vadd.f32 %v1114, 1.0
    %v1116 = vrcp.pop %v1115
    %v1117 = vmul.f32 1.0, %v1116
    %v1118 = vsel %vm61, %v1111, %v1117
    %v1119 = vmul.f32 %v1118, %v914
    %1121 = vrot.lane.b32.xlu0 %v1118, 64
    %v1122 = vpop.permute.xlu0 %1121
    %v1124 = vmul.f32 %v1118, %v1122
    %1126 = vrot.lane.b32.xlu0 %v1124, 32
    %v1127 = vpop.permute.xlu0 %1126
    %v1129 = vadd.f32 %v1119, %v1127
    %v1130 = vtanh.pop %v1129
    %1132 = vrot.lane.b32.xlu0 %v1130, 64
    %v1133 = vpop.permute.xlu0 %1132
    %v1135 = vmul.f32 %v1118, %v1133
    %1137 = vrot.lane.b32.xlu0 %v1135, 32
    %v1138 = vpop.permute.xlu0 %1137
    %1140 = vst.msk [vmem:[#allocation2 + $0x20] sm:$0x3] %vm279, %v1138
    %s1141 = scalar_lea.vmem %s0, 10
    %v1142 = vld [vmem:[%s1141] sm:$0x3]
    %1143 = vrot.lane.b32.xlu0 %v1029, 64
    %v1144 = vpop.permute.xlu0 %1143
    %v1146 = vsel %vm62, %v1142, %v1144
    %v1148 = vsel %vm73, %v1146, 0
    %1150 = vmatprep.subr.mxu0 0.0
    %1151 = vmatpush1.msra.mxu0 %v25
    %1152 = vmatprep.subr.mxu0 0.0
    %1153 = vmatpush1.msra.mxu0 %v26
    %1154 = vmatprep.subr.mxu0 0.0
    %1155 = vmatpush1.msra.mxu0 %v27
    %1156 = vmatprep.subr.mxu0 0.0
    %1157 = vmatpush1.msra.mxu0 %v28
    %1158 = vmatprep.subr.mxu0 0.0
    %1159 = vmatpush1.msra.mxu0 %v29
    %1160 = vmatprep.subr.mxu0 0.0
    %1161 = vmatpush1.msra.mxu0 %v30
    %1162 = vmatprep.subr.mxu0 0.0
    %1163 = vmatpush1.msra.mxu0 %v31
    %1164 = vmatprep.subr.mxu0 0.0
    %1165 = vmatpush1.msra.mxu0 %v32
    %1166 = vmatprep.subr.mxu0 0.0
    %1167 = vmatpush1.msra.mxu0 0.0
    %1168 = vmatprep.subr.mxu0 0.0
    %1169 = vmatpush1.msra.mxu0 0.0
    %1170 = vmatprep.subr.mxu0 0.0
    %1171 = vmatpush1.msra.mxu0 0.0
    %1172 = vmatprep.subr.mxu0 0.0
    %1173 = vmatpush1.msra.mxu0 0.0
    %1174 = vmatprep.subr.mxu0 0.0
    %1175 = vmatpush1.msra.mxu0 0.0
    %1176 = vmatprep.subr.mxu0 0.0
    %1177 = vmatpush1.msra.mxu0 0.0
    %1178 = vmatprep.subr.mxu0 0.0
    %1179 = vmatpush1.msra.mxu0 0.0
    %1180 = vmatprep.subr.mxu0 0.0
    %1181 = vmatpush1.msra.mxu0 0.0
    %1182 = vmatprep.subr.mxu0 0.0
    %1183 = vmatpush1.msra.mxu0 0.0
    %1184 = vmatprep.subr.mxu0 0.0
    %1185 = vmatpush1.msra.mxu0 0.0
    %1186 = vmatprep.subr.mxu0 0.0
    %1187 = vmatpush1.msra.mxu0 0.0
    %1188 = vmatprep.subr.mxu0 0.0
    %1189 = vmatpush1.msra.mxu0 0.0
    %1190 = vmatprep.subr.mxu0 0.0
    %1191 = vmatpush1.msra.mxu0 0.0
    %1192 = vmatprep.subr.mxu0 0.0
    %1193 = vmatpush1.msra.mxu0 0.0
    %1194 = vmatprep.subr.mxu0 0.0
    %1195 = vmatpush1.msra.mxu0 0.0
    %1196 = vmatprep.subr.mxu0 0.0
    %1197 = vmatpush1.msra.mxu0 0.0
    %1198 = vmatprep.subr.mxu0 0.0
    %1199 = vmatpush1.msra.mxu0 0.0
    %1200 = vmatprep.subr.mxu0 0.0
    %1201 = vmatpush1.msra.mxu0 0.0
    %1202 = vmatprep.subr.mxu0 0.0
    %1203 = vmatpush1.msra.mxu0 0.0
    %1204 = vmatprep.subr.mxu0 0.0
    %1205 = vmatpush1.msra.mxu0 0.0
    %1206 = vmatprep.subr.mxu0 0.0
    %1207 = vmatpush1.msra.mxu0 0.0
    %1208 = vmatprep.subr.mxu0 0.0
    %1209 = vmatpush1.msra.mxu0 0.0
    %1210 = vmatprep.subr.mxu0 0.0
    %1211 = vmatpush1.msra.mxu0 0.0
    %1212 = vmatprep.subr.mxu0 0.0
    %1213 = vmatpush1.msra.mxu0 0.0
    %1214 = vmatprep.mubr.f32.mxu0 0.0
    %1215 = vmatmul.mubr.f32.gmra.mrb[0].mxu0 %v1148
    %v1216 = vpop.f32.mrb[0].mxu0
    %v1217 = vadd.f32 %v47, %v1216
    %v1218 = vpop.f32.mrb[0].mxu0
    %1219 = vdwg.mxu0
    %v1220 = vtanh.pop %v1217
    %v1221 = vxor.u32 %v1217, 2147483648
    %v1222 = vmul.f32 %v1221, 1.442695
    %v1223 = vpow.pop %v1222
    %v1224 = vadd.f32 %v1223, 1.0
    %v1225 = vrcp.pop %v1224
    %v1226 = vmul.f32 1.0, %v1225
    %v1227 = vsel %vm61, %v1220, %v1226
    %v1228 = vmul.f32 %v1227, %v1023
    %1230 = vrot.lane.b32.xlu0 %v1227, 64
    %v1231 = vpop.permute.xlu0 %1230
    %v1233 = vmul.f32 %v1227, %v1231
    %1235 = vrot.lane.b32.xlu0 %v1233, 32
    %v1236 = vpop.permute.xlu0 %1235
    %v1238 = vadd.f32 %v1228, %v1236
    %v1239 = vtanh.pop %v1238
    %1241 = vrot.lane.b32.xlu0 %v1239, 64
    %v1242 = vpop.permute.xlu0 %1241
    %v1244 = vmul.f32 %v1227, %v1242
    %1246 = vrot.lane.b32.xlu0 %v1244, 32
    %v1247 = vpop.permute.xlu0 %1246
    %1249 = vrot.lane.b32.xlu0 %v1135, 64
    %v1250 = vpop.permute.xlu0 %1249
    %v1252 = vsel %vm62, %v1247, %v1250
    %v1254 = vsel %vm73, %v1252, 0
    %1256 = vmatprep.subr.mxu0 0.0
    %1257 = vmatpush1.msra.mxu0 %v34
    %1258 = vmatprep.subr.mxu0 0.0
    %1259 = vmatpush1.msra.mxu0 %v35
    %1260 = vmatprep.subr.mxu0 0.0
    %1261 = vmatpush1.msra.mxu0 %v36
    %1262 = vmatprep.subr.mxu0 0.0
    %1263 = vmatpush1.msra.mxu0 %v37
    %1264 = vmatprep.subr.mxu0 0.0
    %1265 = vmatpush1.msra.mxu0 %v38
    %1266 = vmatprep.subr.mxu0 0.0
    %1267 = vmatpush1.msra.mxu0 %v39
    %1268 = vmatprep.subr.mxu0 0.0
    %1269 = vmatpush1.msra.mxu0 %v40
    %1270 = vmatprep.subr.mxu0 0.0
    %1271 = vmatpush1.msra.mxu0 %v41
    %1272 = vmatprep.subr.mxu0 0.0
    %1273 = vmatpush1.msra.mxu0 0.0
    %1274 = vmatprep.subr.mxu0 0.0
    %1275 = vmatpush1.msra.mxu0 0.0
    %1276 = vmatprep.subr.mxu0 0.0
    %1277 = vmatpush1.msra.mxu0 0.0
    %1278 = vmatprep.subr.mxu0 0.0
    %1279 = vmatpush1.msra.mxu0 0.0
    %1280 = vmatprep.subr.mxu0 0.0
    %1281 = vmatpush1.msra.mxu0 0.0
    %1282 = vmatprep.subr.mxu0 0.0
    %1283 = vmatpush1.msra.mxu0 0.0
    %1284 = vmatprep.subr.mxu0 0.0
    %1285 = vmatpush1.msra.mxu0 0.0
    %1286 = vmatprep.subr.mxu0 0.0
    %1287 = vmatpush1.msra.mxu0 0.0
    %1288 = vmatprep.subr.mxu0 0.0
    %1289 = vmatpush1.msra.mxu0 0.0
    %1290 = vmatprep.subr.mxu0 0.0
    %1291 = vmatpush1.msra.mxu0 0.0
    %1292 = vmatprep.subr.mxu0 0.0
    %1293 = vmatpush1.msra.mxu0 0.0
    %1294 = vmatprep.subr.mxu0 0.0
    %1295 = vmatpush1.msra.mxu0 0.0
    %1296 = vmatprep.subr.mxu0 0.0
    %1297 = vmatpush1.msra.mxu0 0.0
    %1298 = vmatprep.subr.mxu0 0.0
    %1299 = vmatpush1.msra.mxu0 0.0
    %1300 = vmatprep.subr.mxu0 0.0
    %1301 = vmatpush1.msra.mxu0 0.0
    %1302 = vmatprep.subr.mxu0 0.0
    %1303 = vmatpush1.msra.mxu0 0.0
    %1304 = vmatprep.subr.mxu0 0.0
    %1305 = vmatpush1.msra.mxu0 0.0
    %1306 = vmatprep.subr.mxu0 0.0
    %1307 = vmatpush1.msra.mxu0 0.0
    %1308 = vmatprep.subr.mxu0 0.0
    %1309 = vmatpush1.msra.mxu0 0.0
    %1310 = vmatprep.subr.mxu0 0.0
    %1311 = vmatpush1.msra.mxu0 0.0
    %1312 = vmatprep.subr.mxu0 0.0
    %1313 = vmatpush1.msra.mxu0 0.0
    %1314 = vmatprep.subr.mxu0 0.0
    %1315 = vmatpush1.msra.mxu0 0.0
    %1316 = vmatprep.subr.mxu0 0.0
    %1317 = vmatpush1.msra.mxu0 0.0
    %1318 = vmatprep.subr.mxu0 0.0
    %1319 = vmatpush1.msra.mxu0 0.0
    %1320 = vmatprep.mubr.f32.mxu0 0.0
    %1321 = vmatmul.mubr.f32.gmra.mrb[0].mxu0 %v1254
    %v1322 = vpop.f32.mrb[0].mxu0
    %v1323 = vadd.f32 %v55, %v1322
    %v1324 = vpop.f32.mrb[0].mxu0
    %1325 = vdwg.mxu0
    %v1326 = vtanh.pop %v1323
    %v1327 = vxor.u32 %v1323, 2147483648
    %v1328 = vmul.f32 %v1327, 1.442695
    %v1329 = vpow.pop %v1328
    %v1330 = vadd.f32 %v1329, 1.0
    %v1331 = vrcp.pop %v1330
    %v1332 = vmul.f32 1.0, %v1331
    %v1333 = vsel %vm61, %v1326, %v1332
    %v1334 = vmul.f32 %v1333, %v1129
    %1336 = vrot.lane.b32.xlu0 %v1333, 64
    %v1337 = vpop.permute.xlu0 %1336
    %v1339 = vmul.f32 %v1333, %v1337
    %1341 = vrot.lane.b32.xlu0 %v1339, 32
    %v1342 = vpop.permute.xlu0 %1341
    %v1344 = vadd.f32 %v1334, %v1342
    %v1345 = vtanh.pop %v1344
    %1347 = vrot.lane.b32.xlu0 %v1345, 64
    %v1348 = vpop.permute.xlu0 %1347
    %v1350 = vmul.f32 %v1333, %v1348
    %1352 = vrot.lane.b32.xlu0 %v1350, 32
    %v1353 = vpop.permute.xlu0 %1352
    %1355 = vst.msk [vmem:[#allocation2 + $0x28] sm:$0x3] %vm279, %v1353
    %s1356 = scalar_lea.vmem %s0, 12
    %v1357 = vld [vmem:[%s1356] sm:$0x3]
    %1358 = vrot.lane.b32.xlu0 %v1244, 64
    %v1359 = vpop.permute.xlu0 %1358
    %v1361 = vsel %vm62, %v1357, %v1359
    %v1363 = vsel %vm73, %v1361, 0
    %1365 = vmatprep.subr.mxu0 0.0
    %1366 = vmatpush1.msra.mxu0 %v25
    %1367 = vmatprep.subr.mxu0 0.0
    %1368 = vmatpush1.msra.mxu0 %v26
    %1369 = vmatprep.subr.mxu0 0.0
    %1370 = vmatpush1.msra.mxu0 %v27
    %1371 = vmatprep.subr.mxu0 0.0
    %1372 = vmatpush1.msra.mxu0 %v28
    %1373 = vmatprep.subr.mxu0 0.0
    %1374 = vmatpush1.msra.mxu0 %v29
    %1375 = vmatprep.subr.mxu0 0.0
    %1376 = vmatpush1.msra.mxu0 %v30
    %1377 = vmatprep.subr.mxu0 0.0
    %1378 = vmatpush1.msra.mxu0 %v31
    %1379 = vmatprep.subr.mxu0 0.0
    %1380 = vmatpush1.msra.mxu0 %v32
    %1381 = vmatprep.subr.mxu0 0.0
    %1382 = vmatpush1.msra.mxu0 0.0
    %1383 = vmatprep.subr.mxu0 0.0
    %1384 = vmatpush1.msra.mxu0 0.0
    %1385 = vmatprep.subr.mxu0 0.0
    %1386 = vmatpush1.msra.mxu0 0.0
    %1387 = vmatprep.subr.mxu0 0.0
    %1388 = vmatpush1.msra.mxu0 0.0
    %1389 = vmatprep.subr.mxu0 0.0
    %1390 = vmatpush1.msra.mxu0 0.0
    %1391 = vmatprep.subr.mxu0 0.0
    %1392 = vmatpush1.msra.mxu0 0.0
    %1393 = vmatprep.subr.mxu0 0.0
    %1394 = vmatpush1.msra.mxu0 0.0
    %1395 = vmatprep.subr.mxu0 0.0
    %1396 = vmatpush1.msra.mxu0 0.0
    %1397 = vmatprep.subr.mxu0 0.0
    %1398 = vmatpush1.msra.mxu0 0.0
    %1399 = vmatprep.subr.mxu0 0.0
    %1400 = vmatpush1.msra.mxu0 0.0
    %1401 = vmatprep.subr.mxu0 0.0
    %1402 = vmatpush1.msra.mxu0 0.0
    %1403 = vmatprep.subr.mxu0 0.0
    %1404 = vmatpush1.msra.mxu0 0.0
    %1405 = vmatprep.subr.mxu0 0.0
    %1406 = vmatpush1.msra.mxu0 0.0
    %1407 = vmatprep.subr.mxu0 0.0
    %1408 = vmatpush1.msra.mxu0 0.0
    %1409 = vmatprep.subr.mxu0 0.0
    %1410 = vmatpush1.msra.mxu0 0.0
    %1411 = vmatprep.subr.mxu0 0.0
    %1412 = vmatpush1.msra.mxu0 0.0
    %1413 = vmatprep.subr.mxu0 0.0
    %1414 = vmatpush1.msra.mxu0 0.0
    %1415 = vmatprep.subr.mxu0 0.0
    %1416 = vmatpush1.msra.mxu0 0.0
    %1417 = vmatprep.subr.mxu0 0.0
    %1418 = vmatpush1.msra.mxu0 0.0
    %1419 = vmatprep.subr.mxu0 0.0
    %1420 = vmatpush1.msra.mxu0 0.0
    %1421 = vmatprep.subr.mxu0 0.0
    %1422 = vmatpush1.msra.mxu0 0.0
    %1423 = vmatprep.subr.mxu0 0.0
    %1424 = vmatpush1.msra.mxu0 0.0
    %1425 = vmatprep.subr.mxu0 0.0
    %1426 = vmatpush1.msra.mxu0 0.0
    %1427 = vmatprep.subr.mxu0 0.0
    %1428 = vmatpush1.msra.mxu0 0.0
    %1429 = vmatprep.mubr.f32.mxu0 0.0
    %1430 = vmatmul.mubr.f32.gmra.mrb[0].mxu0 %v1363
    %v1431 = vpop.f32.mrb[0].mxu0
    %v1432 = vadd.f32 %v47, %v1431
    %v1433 = vpop.f32.mrb[0].mxu0
    %1434 = vdwg.mxu0
    %v1435 = vtanh.pop %v1432
    %v1436 = vxor.u32 %v1432, 2147483648
    %v1437 = vmul.f32 %v1436, 1.442695
    %v1438 = vpow.pop %v1437
    %v1439 = vadd.f32 %v1438, 1.0
    %v1440 = vrcp.pop %v1439
    %v1441 = vmul.f32 1.0, %v1440
    %v1442 = vsel %vm61, %v1435, %v1441
    %v1443 = vmul.f32 %v1442, %v1238
    %1445 = vrot.lane.b32.xlu0 %v1442, 64
    %v1446 = vpop.permute.xlu0 %1445
    %v1448 = vmul.f32 %v1442, %v1446
    %1450 = vrot.lane.b32.xlu0 %v1448, 32
    %v1451 = vpop.permute.xlu0 %1450
    %v1453 = vadd.f32 %v1443, %v1451
    %v1454 = vtanh.pop %v1453
    %1456 = vrot.lane.b32.xlu0 %v1454, 64
    %v1457 = vpop.permute.xlu0 %1456
    %v1459 = vmul.f32 %v1442, %v1457
    %1461 = vrot.lane.b32.xlu0 %v1459, 32
    %v1462 = vpop.permute.xlu0 %1461
    %1464 = vrot.lane.b32.xlu0 %v1350, 64
    %v1465 = vpop.permute.xlu0 %1464
    %v1467 = vsel %vm62, %v1462, %v1465
    %v1469 = vsel %vm73, %v1467, 0
    %1471 = vmatprep.subr.mxu0 0.0
    %1472 = vmatpush1.msra.mxu0 %v34
    %1473 = vmatprep.subr.mxu0 0.0
    %1474 = vmatpush1.msra.mxu0 %v35
    %1475 = vmatprep.subr.mxu0 0.0
    %1476 = vmatpush1.msra.mxu0 %v36
    %1477 = vmatprep.subr.mxu0 0.0
    %1478 = vmatpush1.msra.mxu0 %v37
    %1479 = vmatprep.subr.mxu0 0.0
    %1480 = vmatpush1.msra.mxu0 %v38
    %1481 = vmatprep.subr.mxu0 0.0
    %1482 = vmatpush1.msra.mxu0 %v39
    %1483 = vmatprep.subr.mxu0 0.0
    %1484 = vmatpush1.msra.mxu0 %v40
    %1485 = vmatprep.subr.mxu0 0.0
    %1486 = vmatpush1.msra.mxu0 %v41
    %1487 = vmatprep.subr.mxu0 0.0
    %1488 = vmatpush1.msra.mxu0 0.0
    %1489 = vmatprep.subr.mxu0 0.0
    %1490 = vmatpush1.msra.mxu0 0.0
    %1491 = vmatprep.subr.mxu0 0.0
    %1492 = vmatpush1.msra.mxu0 0.0
    %1493 = vmatprep.subr.mxu0 0.0
    %1494 = vmatpush1.msra.mxu0 0.0
    %1495 = vmatprep.subr.mxu0 0.0
    %1496 = vmatpush1.msra.mxu0 0.0
    %1497 = vmatprep.subr.mxu0 0.0
    %1498 = vmatpush1.msra.mxu0 0.0
    %1499 = vmatprep.subr.mxu0 0.0
    %1500 = vmatpush1.msra.mxu0 0.0
    %1501 = vmatprep.subr.mxu0 0.0
    %1502 = vmatpush1.msra.mxu0 0.0
    %1503 = vmatprep.subr.mxu0 0.0
    %1504 = vmatpush1.msra.mxu0 0.0
    %1505 = vmatprep.subr.mxu0 0.0
    %1506 = vmatpush1.msra.mxu0 0.0
    %1507 = vmatprep.subr.mxu0 0.0
    %1508 = vmatpush1.msra.mxu0 0.0
    %1509 = vmatprep.subr.mxu0 0.0
    %1510 = vmatpush1.msra.mxu0 0.0
    %1511 = vmatprep.subr.mxu0 0.0
    %1512 = vmatpush1.msra.mxu0 0.0
    %1513 = vmatprep.subr.mxu0 0.0
    %1514 = vmatpush1.msra.mxu0 0.0
    %1515 = vmatprep.subr.mxu0 0.0
    %1516 = vmatpush1.msra.mxu0 0.0
    %1517 = vmatprep.subr.mxu0 0.0
    %1518 = vmatpush1.msra.mxu0 0.0
    %1519 = vmatprep.subr.mxu0 0.0
    %1520 = vmatpush1.msra.mxu0 0.0
    %1521 = vmatprep.subr.mxu0 0.0
    %1522 = vmatpush1.msra.mxu0 0.0
    %1523 = vmatprep.subr.mxu0 0.0
    %1524 = vmatpush1.msra.mxu0 0.0
    %1525 = vmatprep.subr.mxu0 0.0
    %1526 = vmatpush1.msra.mxu0 0.0
    %1527 = vmatprep.subr.mxu0 0.0
    %1528 = vmatpush1.msra.mxu0 0.0
    %1529 = vmatprep.subr.mxu0 0.0
    %1530 = vmatpush1.msra.mxu0 0.0
    %1531 = vmatprep.subr.mxu0 0.0
    %1532 = vmatpush1.msra.mxu0 0.0
    %1533 = vmatprep.subr.mxu0 0.0
    %1534 = vmatpush1.msra.mxu0 0.0
    %1535 = vmatprep.mubr.f32.mxu0 0.0
    %1536 = vmatmul.mubr.f32.gmra.mrb[0].mxu0 %v1469
    %v1537 = vpop.f32.mrb[0].mxu0
    %v1538 = vadd.f32 %v55, %v1537
    %v1539 = vpop.f32.mrb[0].mxu0
    %1540 = vdwg.mxu0
    %v1541 = vtanh.pop %v1538
    %v1542 = vxor.u32 %v1538, 2147483648
    %v1543 = vmul.f32 %v1542, 1.442695
    %v1544 = vpow.pop %v1543
    %v1545 = vadd.f32 %v1544, 1.0
    %v1546 = vrcp.pop %v1545
    %v1547 = vmul.f32 1.0, %v1546
    %v1548 = vsel %vm61, %v1541, %v1547
    %v1549 = vmul.f32 %v1548, %v1344
    %1551 = vrot.lane.b32.xlu0 %v1548, 64
    %v1552 = vpop.permute.xlu0 %1551
    %v1554 = vmul.f32 %v1548, %v1552
    %1556 = vrot.lane.b32.xlu0 %v1554, 32
    %v1557 = vpop.permute.xlu0 %1556
    %v1559 = vadd.f32 %v1549, %v1557
    %v1560 = vtanh.pop %v1559
    %1562 = vrot.lane.b32.xlu0 %v1560, 64
    %v1563 = vpop.permute.xlu0 %1562
    %v1565 = vmul.f32 %v1548, %v1563
    %1567 = vrot.lane.b32.xlu0 %v1565, 32
    %v1568 = vpop.permute.xlu0 %1567
    %1570 = vst.msk [vmem:[#allocation2 + $0x30] sm:$0x3] %vm279, %v1568
    %s1571 = scalar_lea.vmem %s0, 14
    %v1572 = vld [vmem:[%s1571] sm:$0x3]
    %1573 = vrot.lane.b32.xlu0 %v1459, 64
    %v1574 = vpop.permute.xlu0 %1573
    %v1576 = vsel %vm62, %v1572, %v1574
    %v1578 = vsel %vm73, %v1576, 0
    %1580 = vmatprep.subr.mxu0 0.0
    %1581 = vmatpush1.msra.mxu0 %v25
    %1582 = vmatprep.subr.mxu0 0.0
    %1583 = vmatpush1.msra.mxu0 %v26
    %1584 = vmatprep.subr.mxu0 0.0
    %1585 = vmatpush1.msra.mxu0 %v27
    %1586 = vmatprep.subr.mxu0 0.0
    %1587 = vmatpush1.msra.mxu0 %v28
    %1588 = vmatprep.subr.mxu0 0.0
    %1589 = vmatpush1.msra.mxu0 %v29
    %1590 = vmatprep.subr.mxu0 0.0
    %1591 = vmatpush1.msra.mxu0 %v30
    %1592 = vmatprep.subr.mxu0 0.0
    %1593 = vmatpush1.msra.mxu0 %v31
    %1594 = vmatprep.subr.mxu0 0.0
    %1595 = vmatpush1.msra.mxu0 %v32
    %1596 = vmatprep.subr.mxu0 0.0
    %1597 = vmatpush1.msra.mxu0 0.0
    %1598 = vmatprep.subr.mxu0 0.0
    %1599 = vmatpush1.msra.mxu0 0.0
    %1600 = vmatprep.subr.mxu0 0.0
    %1601 = vmatpush1.msra.mxu0 0.0
    %1602 = vmatprep.subr.mxu0 0.0
    %1603 = vmatpush1.msra.mxu0 0.0
    %1604 = vmatprep.subr.mxu0 0.0
    %1605 = vmatpush1.msra.mxu0 0.0
    %1606 = vmatprep.subr.mxu0 0.0
    %1607 = vmatpush1.msra.mxu0 0.0
    %1608 = vmatprep.subr.mxu0 0.0
    %1609 = vmatpush1.msra.mxu0 0.0
    %1610 = vmatprep.subr.mxu0 0.0
    %1611 = vmatpush1.msra.mxu0 0.0
    %1612 = vmatprep.subr.mxu0 0.0
    %1613 = vmatpush1.msra.mxu0 0.0
    %1614 = vmatprep.subr.mxu0 0.0
    %1615 = vmatpush1.msra.mxu0 0.0
    %1616 = vmatprep.subr.mxu0 0.0
    %1617 = vmatpush1.msra.mxu0 0.0
    %1618 = vmatprep.subr.mxu0 0.0
    %1619 = vmatpush1.msra.mxu0 0.0
    %1620 = vmatprep.subr.mxu0 0.0
    %1621 = vmatpush1.msra.mxu0 0.0
    %1622 = vmatprep.subr.mxu0 0.0
    %1623 = vmatpush1.msra.mxu0 0.0
    %1624 = vmatprep.subr.mxu0 0.0
    %1625 = vmatpush1.msra.mxu0 0.0
    %1626 = vmatprep.subr.mxu0 0.0
    %1627 = vmatpush1.msra.mxu0 0.0
    %1628 = vmatprep.subr.mxu0 0.0
    %1629 = vmatpush1.msra.mxu0 0.0
    %1630 = vmatprep.subr.mxu0 0.0
    %1631 = vmatpush1.msra.mxu0 0.0
    %1632 = vmatprep.subr.mxu0 0.0
    %1633 = vmatpush1.msra.mxu0 0.0
    %1634 = vmatprep.subr.mxu0 0.0
    %1635 = vmatpush1.msra.mxu0 0.0
    %1636 = vmatprep.subr.mxu0 0.0
    %1637 = vmatpush1.msra.mxu0 0.0
    %1638 = vmatprep.subr.mxu0 0.0
    %1639 = vmatpush1.msra.mxu0 0.0
    %1640 = vmatprep.subr.mxu0 0.0
    %1641 = vmatpush1.msra.mxu0 0.0
    %1642 = vmatprep.subr.mxu0 0.0
    %1643 = vmatpush1.msra.mxu0 0.0
    %1644 = vmatprep.mubr.f32.mxu0 0.0
    %1645 = vmatmul.mubr.f32.gmra.mrb[0].mxu0 %v1578
    %v1646 = vpop.f32.mrb[0].mxu0
    %v1647 = vadd.f32 %v47, %v1646
    %v1648 = vpop.f32.mrb[0].mxu0
    %1649 = vdwg.mxu0
    %v1650 = vtanh.pop %v1647
    %v1651 = vxor.u32 %v1647, 2147483648
    %v1652 = vmul.f32 %v1651, 1.442695
    %v1653 = vpow.pop %v1652
    %v1654 = vadd.f32 %v1653, 1.0
    %v1655 = vrcp.pop %v1654
    %v1656 = vmul.f32 1.0, %v1655
    %v1657 = vsel %vm61, %v1650, %v1656
    %v1658 = vmul.f32 %v1657, %v1453
    %1660 = vrot.lane.b32.xlu0 %v1657, 64
    %v1661 = vpop.permute.xlu0 %1660
    %v1663 = vmul.f32 %v1657, %v1661
    %1665 = vrot.lane.b32.xlu0 %v1663, 32
    %v1666 = vpop.permute.xlu0 %1665
    %v1668 = vadd.f32 %v1658, %v1666
    %v1669 = vtanh.pop %v1668
    %1671 = vrot.lane.b32.xlu0 %v1669, 64
    %v1672 = vpop.permute.xlu0 %1671
    %v1674 = vmul.f32 %v1657, %v1672
    %1676 = vrot.lane.b32.xlu0 %v1674, 32
    %v1677 = vpop.permute.xlu0 %1676
    %1679 = vrot.lane.b32.xlu0 %v1565, 64
    %v1680 = vpop.permute.xlu0 %1679
    %v1682 = vsel %vm62, %v1677, %v1680
    %v1684 = vsel %vm73, %v1682, 0
    %1686 = vmatprep.subr.mxu0 0.0
    %1687 = vmatpush1.msra.mxu0 %v34
    %1688 = vmatprep.subr.mxu0 0.0
    %1689 = vmatpush1.msra.mxu0 %v35
    %1690 = vmatprep.subr.mxu0 0.0
    %1691 = vmatpush1.msra.mxu0 %v36
    %1692 = vmatprep.subr.mxu0 0.0
    %1693 = vmatpush1.msra.mxu0 %v37
    %1694 = vmatprep.subr.mxu0 0.0
    %1695 = vmatpush1.msra.mxu0 %v38
    %1696 = vmatprep.subr.mxu0 0.0
    %1697 = vmatpush1.msra.mxu0 %v39
    %1698 = vmatprep.subr.mxu0 0.0
    %1699 = vmatpush1.msra.mxu0 %v40
    %1700 = vmatprep.subr.mxu0 0.0
    %1701 = vmatpush1.msra.mxu0 %v41
    %1702 = vmatprep.subr.mxu0 0.0
    %1703 = vmatpush1.msra.mxu0 0.0
    %1704 = vmatprep.subr.mxu0 0.0
    %1705 = vmatpush1.msra.mxu0 0.0
    %1706 = vmatprep.subr.mxu0 0.0
    %1707 = vmatpush1.msra.mxu0 0.0
    %1708 = vmatprep.subr.mxu0 0.0
    %1709 = vmatpush1.msra.mxu0 0.0
    %1710 = vmatprep.subr.mxu0 0.0
    %1711 = vmatpush1.msra.mxu0 0.0
    %1712 = vmatprep.subr.mxu0 0.0
    %1713 = vmatpush1.msra.mxu0 0.0
    %1714 = vmatprep.subr.mxu0 0.0
    %1715 = vmatpush1.msra.mxu0 0.0
    %1716 = vmatprep.subr.mxu0 0.0
    %1717 = vmatpush1.msra.mxu0 0.0
    %1718 = vmatprep.subr.mxu0 0.0
    %1719 = vmatpush1.msra.mxu0 0.0
    %1720 = vmatprep.subr.mxu0 0.0
    %1721 = vmatpush1.msra.mxu0 0.0
    %1722 = vmatprep.subr.mxu0 0.0
    %1723 = vmatpush1.msra.mxu0 0.0
    %1724 = vmatprep.subr.mxu0 0.0
    %1725 = vmatpush1.msra.mxu0 0.0
    %1726 = vmatprep.subr.mxu0 0.0
    %1727 = vmatpush1.msra.mxu0 0.0
    %1728 = vmatprep.subr.mxu0 0.0
    %1729 = vmatpush1.msra.mxu0 0.0
    %1730 = vmatprep.subr.mxu0 0.0
    %1731 = vmatpush1.msra.mxu0 0.0
    %1732 = vmatprep.subr.mxu0 0.0
    %1733 = vmatpush1.msra.mxu0 0.0
    %1734 = vmatprep.subr.mxu0 0.0
    %1735 = vmatpush1.msra.mxu0 0.0
    %1736 = vmatprep.subr.mxu0 0.0
    %1737 = vmatpush1.msra.mxu0 0.0
    %1738 = vmatprep.subr.mxu0 0.0
    %1739 = vmatpush1.msra.mxu0 0.0
    %1740 = vmatprep.subr.mxu0 0.0
    %1741 = vmatpush1.msra.mxu0 0.0
    %1742 = vmatprep.subr.mxu0 0.0
    %1743 = vmatpush1.msra.mxu0 0.0
    %1744 = vmatprep.subr.mxu0 0.0
    %1745 = vmatpush1.msra.mxu0 0.0
    %1746 = vmatprep.subr.mxu0 0.0
    %1747 = vmatpush1.msra.mxu0 0.0
    %1748 = vmatprep.subr.mxu0 0.0
    %1749 = vmatpush1.msra.mxu0 0.0
    %1750 = vmatprep.mubr.f32.mxu0 0.0
    %1751 = vmatmul.mubr.f32.gmra.mrb[0].mxu0 %v1684
    %v1752 = vpop.f32.mrb[0].mxu0
    %v1753 = vadd.f32 %v55, %v1752
    %v1754 = vpop.f32.mrb[0].mxu0
    %1755 = vdwg.mxu0
    %v1756 = vtanh.pop %v1753
    %v1757 = vxor.u32 %v1753, 2147483648
    %v1758 = vmul.f32 %v1757, 1.442695
    %v1759 = vpow.pop %v1758
    %v1760 = vadd.f32 %v1759, 1.0
    %v1761 = vrcp.pop %v1760
    %v1762 = vmul.f32 1.0, %v1761
    %v1763 = vsel %vm61, %v1756, %v1762
    %v1764 = vmul.f32 %v1763, %v1559
    %1766 = vrot.lane.b32.xlu0 %v1763, 64
    %v1767 = vpop.permute.xlu0 %1766
    %v1769 = vmul.f32 %v1763, %v1767
    %1771 = vrot.lane.b32.xlu0 %v1769, 32
    %v1772 = vpop.permute.xlu0 %1771
    %v1774 = vadd.f32 %v1764, %v1772
    %v1775 = vtanh.pop %v1774
    %1777 = vrot.lane.b32.xlu0 %v1775, 64
    %v1778 = vpop.permute.xlu0 %1777
    %v1780 = vmul.f32 %v1763, %v1778
    %1782 = vrot.lane.b32.xlu0 %v1780, 32
    %v1783 = vpop.permute.xlu0 %1782
    %1785 = vst.msk [vmem:[#allocation2 + $0x38] sm:$0x3] %vm279, %v1783
    %v1786 = vld [vmem:[#allocation2] sm:$0xff]
    %v1787 = vld [vmem:[#allocation2 + $0x8] sm:$0xff]
    %v1788 = vld [vmem:[#allocation2 + $0x10] sm:$0xff]
    %v1789 = vld [vmem:[#allocation2 + $0x18] sm:$0xff]
    %v1790 = vld [vmem:[#allocation2 + $0x20] sm:$0xff]
    %v1791 = vld [vmem:[#allocation2 + $0x28] sm:$0xff]
    %v1792 = vld [vmem:[#allocation2 + $0x30] sm:$0xff]
    %v1793 = vld [vmem:[#allocation2 + $0x38] sm:$0xff]
    %v1794 = vld [vmem:[%s3] sm:$0xff]
    %v1795 = vld [vmem:[%s3 + $0x8] sm:$0xff]
    %v1796 = vld [vmem:[%s3 + $0x10] sm:$0xff]
    %v1797 = vld [vmem:[%s3 + $0x18] sm:$0xff]
    %v1798 = vld [vmem:[%s4] sm:$0x1]
    %v1800 = vlaneseq
    %v1801 = vshrl.u32 %v1800, 7
    %v1802 = vsub.s32 0, %v1801
    %v1803 = vrot.slane %v1798, %v1802
    %v1806 = vsel %vm62, %v1786, 0
    %v1809 = vsel %vm62, %v1787, 0
    %v1812 = vsel %vm62, %v1788, 0
    %v1815 = vsel %vm62, %v1789, 0
    %v1818 = vsel %vm62, %v1790, 0
    %v1821 = vsel %vm62, %v1791, 0
    %v1824 = vsel %vm62, %v1792, 0
    %v1827 = vsel %vm62, %v1793, 0
    %1829 = vmatprep.subr.mxu0 0.0
    %1830 = vmatpush1.msra.mxu0 %v1794
    %1831 = vmatprep.subr.mxu0 0.0
    %1832 = vmatpush1.msra.mxu0 %v1795
    %1833 = vmatprep.subr.mxu0 0.0
    %1834 = vmatpush1.msra.mxu0 %v1796
    %1835 = vmatprep.subr.mxu0 0.0
    %1836 = vmatpush1.msra.mxu0 %v1797
    %1837 = vmatprep.subr.mxu0 0.0
    %1838 = vmatpush1.msra.mxu0 0.0
    %1839 = vmatprep.subr.mxu0 0.0
    %1840 = vmatpush1.msra.mxu0 0.0
    %1841 = vmatprep.subr.mxu0 0.0
    %1842 = vmatpush1.msra.mxu0 0.0
    %1843 = vmatprep.subr.mxu0 0.0
    %1844 = vmatpush1.msra.mxu0 0.0
    %1845 = vmatprep.subr.mxu0 0.0
    %1846 = vmatpush1.msra.mxu0 0.0
    %1847 = vmatprep.subr.mxu0 0.0
    %1848 = vmatpush1.msra.mxu0 0.0
    %1849 = vmatprep.subr.mxu0 0.0
    %1850 = vmatpush1.msra.mxu0 0.0
    %1851 = vmatprep.subr.mxu0 0.0
    %1852 = vmatpush1.msra.mxu0 0.0
    %1853 = vmatprep.subr.mxu0 0.0
    %1854 = vmatpush1.msra.mxu0 0.0
    %1855 = vmatprep.subr.mxu0 0.0
    %1856 = vmatpush1.msra.mxu0 0.0
    %1857 = vmatprep.subr.mxu0 0.0
    %1858 = vmatpush1.msra.mxu0 0.0
    %1859 = vmatprep.subr.mxu0 0.0
    %1860 = vmatpush1.msra.mxu0 0.0
    %1861 = vmatprep.subr.mxu0 0.0
    %1862 = vmatpush1.msra.mxu0 0.0
    %1863 = vmatprep.subr.mxu0 0.0
    %1864 = vmatpush1.msra.mxu0 0.0
    %1865 = vmatprep.subr.mxu0 0.0
    %1866 = vmatpush1.msra.mxu0 0.0
    %1867 = vmatprep.subr.mxu0 0.0
    %1868 = vmatpush1.msra.mxu0 0.0
    %1869 = vmatprep.subr.mxu0 0.0
    %1870 = vmatpush1.msra.mxu0 0.0
    %1871 = vmatprep.subr.mxu0 0.0
    %1872 = vmatpush1.msra.mxu0 0.0
    %1873 = vmatprep.subr.mxu0 0.0
    %1874 = vmatpush1.msra.mxu0 0.0
    %1875 = vmatprep.subr.mxu0 0.0
    %1876 = vmatpush1.msra.mxu0 0.0
    %1877 = vmatprep.subr.mxu0 0.0
    %1878 = vmatpush1.msra.mxu0 0.0
    %1879 = vmatprep.subr.mxu0 0.0
    %1880 = vmatpush1.msra.mxu0 0.0
    %1881 = vmatprep.subr.mxu0 0.0
    %1882 = vmatpush1.msra.mxu0 0.0
    %1883 = vmatprep.subr.mxu0 0.0
    %1884 = vmatpush1.msra.mxu0 0.0
    %1885 = vmatprep.subr.mxu0 0.0
    %1886 = vmatpush1.msra.mxu0 0.0
    %1887 = vmatprep.subr.mxu0 0.0
    %1888 = vmatpush1.msra.mxu0 0.0
    %1889 = vmatprep.subr.mxu0 0.0
    %1890 = vmatpush1.msra.mxu0 0.0
    %1891 = vmatprep.subr.mxu0 0.0
    %1892 = vmatpush1.msra.mxu0 0.0
    %1893 = vmatprep.mubr.f32.mxu0 0.0
    %1894 = vmatmul.mubr.f32.gmra.mrb[0].mxu0 %v1806
    %v1895 = vpop.f32.mrb[0].mxu0
    %v1896 = vadd.f32 %v1803, %v1895
    %v1897 = vpop.f32.mrb[0].mxu0
    %1898 = vmatprep.mubr.f32.mxu0 0.0
    %1899 = vmatmul.mubr.f32.gmra.mrb[0].mxu0 %v1809
    %v1900 = vpop.f32.mrb[0].mxu0
    %v1901 = vadd.f32 %v1803, %v1900
    %v1902 = vpop.f32.mrb[0].mxu0
    %1903 = vmatprep.mubr.f32.mxu0 0.0
    %1904 = vmatmul.mubr.f32.gmra.mrb[0].mxu0 %v1812
    %v1905 = vpop.f32.mrb[0].mxu0
    %v1906 = vadd.f32 %v1803, %v1905
    %v1907 = vpop.f32.mrb[0].mxu0
    %1908 = vmatprep.mubr.f32.mxu0 0.0
    %1909 = vmatmul.mubr.f32.gmra.mrb[0].mxu0 %v1815
    %v1910 = vpop.f32.mrb[0].mxu0
    %v1911 = vadd.f32 %v1803, %v1910
    %v1912 = vpop.f32.mrb[0].mxu0
    %1913 = vmatprep.mubr.f32.mxu0 0.0
    %1914 = vmatmul.mubr.f32.gmra.mrb[0].mxu0 %v1818
    %v1915 = vpop.f32.mrb[0].mxu0
    %v1916 = vadd.f32 %v1803, %v1915
    %v1917 = vpop.f32.mrb[0].mxu0
    %1918 = vmatprep.mubr.f32.mxu0 0.0
    %1919 = vmatmul.mubr.f32.gmra.mrb[0].mxu0 %v1821
    %v1920 = vpop.f32.mrb[0].mxu0
    %v1921 = vadd.f32 %v1803, %v1920
    %v1922 = vpop.f32.mrb[0].mxu0
    %1923 = vmatprep.mubr.f32.mxu0 0.0
    %1924 = vmatmul.mubr.f32.gmra.mrb[0].mxu0 %v1824
    %v1925 = vpop.f32.mrb[0].mxu0
    %v1926 = vadd.f32 %v1803, %v1925
    %v1927 = vpop.f32.mrb[0].mxu0
    %1928 = vmatprep.mubr.f32.mxu0 0.0
    %1929 = vmatmul.mubr.f32.gmra.mrb[0].mxu0 %v1827
    %v1930 = vpop.f32.mrb[0].mxu0
    %v1931 = vadd.f32 %v1803, %v1930
    %v1932 = vpop.f32.mrb[0].mxu0
    %1933 = vdwg.mxu0
    %1934 = vst [vmem:[%s5] sm:$0xff] %v1896
    %1935 = vst [vmem:[%s5 + $0x8] sm:$0xff] %v1901
    %1936 = vst [vmem:[%s5 + $0x10] sm:$0xff] %v1906
    %1937 = vst [vmem:[%s5 + $0x18] sm:$0xff] %v1911
    %1938 = vst [vmem:[%s5 + $0x20] sm:$0xff] %v1916
    %1939 = vst [vmem:[%s5 + $0x28] sm:$0xff] %v1921
    %1940 = vst [vmem:[%s5 + $0x30] sm:$0xff] %v1926
    %1941 = vst [vmem:[%s5 + $0x38] sm:$0xff] %v1931
    %1942 = vst.msk [vmem:[#allocation3] sm:$0x3] %vm279, %v1677
    %1944 = vrot.lane.b32.xlu0 %v1668, 96
    %v1945 = vpop.permute.xlu0 %1944
    %1947 = vst.msk [vmem:[#allocation5] sm:$0x3] %vm279, %v1945
    %s1948 = scalar_lea.vmem [#allocation3], 2
    %1949 = vst.msk [vmem:[%s1948] sm:$0x3] %vm279, %v1783
    %1951 = vrot.lane.b32.xlu0 %v1774, 96
    %v1952 = vpop.permute.xlu0 %1951
    %s1954 = scalar_lea.vmem [#allocation5], 2
    %1955 = vst.msk [vmem:[%s1954] sm:$0x3] %vm279, %v1952
    // Predicated region
    $region22: #{rnn_context_forward.1} parent=1 // pred_check
      _
    $region23: #{rnn_context_forward.1} parent=1 // pred_check_branch
      %1957 = sbr.rel (0) target = $region25
    $region24: #{rnn_context_forward.1} parent=1 // pred_region
      _
    $region25: #{rnn_context_forward.1} parent=1 // pred_fallthru
      _
    // Predicated region
    $region26: #{rnn_context_forward.1} parent=1 // pred_check
      _
    $region27: #{rnn_context_forward.1} parent=1 // pred_check_branch
      %1959 = sbr.rel (0) target = $region29
    $region28: #{rnn_context_forward.1} parent=1 // pred_region
      %s1961 = ssub.s32 64, 64
      %1962 = vsyncadd [#allocation4], %s1961
      %s1963 = sshll.u32 [#allocation3], 4
      %s1964 = int_to_ptr.vmem [resolvable:$true] %s1963
      %1969 = dma.vmem_to_hbm [thread:$0]  %s1964, 64, %s6, [#allocation4], 32, 32, 2
    $region29: #{rnn_context_forward.1} parent=1 // pred_fallthru
      _
    // Predicated region
    $region30: #{rnn_context_forward.1} parent=1 // pred_check
      _
    $region31: #{rnn_context_forward.1} parent=1 // pred_check_branch
      %1971 = sbr.rel (0) target = $region33
    $region32: #{rnn_context_forward.1} parent=1 // pred_region
      %s1973 = ssub.s32 64, 64
      %1974 = vsyncadd [#allocation6], %s1973
      %s1975 = sshll.u32 [#allocation5], 4
      %s1976 = int_to_ptr.vmem [resolvable:$true] %s1975
      %1981 = dma.vmem_to_hbm [thread:$0]  %s1976, 64, %s7, [#allocation6], 32, 32, 2
    $region33: #{rnn_context_forward.1} parent=1 // pred_fallthru
      _
    // Predicated region
    $region34: #{rnn_context_forward.1} parent=1 // pred_check
      _
    $region35: #{rnn_context_forward.1} parent=1 // pred_check_branch
      %1983 = sbr.rel (0) target = $region37
    $region36: #{rnn_context_forward.1} parent=1 // pred_region
      _
    $region37: #{rnn_context_forward.1} parent=1 // pred_fallthru
      _
    // Predicated region
    $region38: #{rnn_context_forward.1} parent=1 // pred_check
      _
    $region39: #{rnn_context_forward.1} parent=1 // pred_check_branch
      %1985 = sbr.rel (0) target = $region41
    $region40: #{rnn_context_forward.1} parent=1 // pred_region
      %1986 = dma.done [#allocation4], 64
    $region41: #{rnn_context_forward.1} parent=1 // pred_fallthru
      _
    // Predicated region
    $region42: #{rnn_context_forward.1} parent=1 // pred_check
      _
    $region43: #{rnn_context_forward.1} parent=1 // pred_check_branch
      %1988 = sbr.rel (0) target = $region45
    $region44: #{rnn_context_forward.1} parent=1 // pred_region
      %1989 = dma.done [#allocation6], 64
    $region45: #{rnn_context_forward.1} parent=1 // pred_fallthru
      _
    %1990 = vsyncpa [#allocation4], 1
    %1991 = vsyncpa [#allocation6], 1

</llo_original>
